<compile_context>
chip_gen: v6e
topology: v6e:2x2x1
jax: 0.10.0
libtpu: 0.0.40
codegen_flags: <defaults>
</compile_context>

<pallas_src>
import functools
import math

import jax
import jax.numpy as jnp
from jax import lax
from jax.experimental import pallas as pl
from jax.experimental.pallas import tpu as pltpu

LANE = 128


def _cdiv(a, b):
    return -(-a // b)


def _round_up(a, b):
    return _cdiv(a, b) * b


def _vmem_bytes(shape, itemsize):
    """Approx VMEM bytes of one buffer, including (sublane, lane) tile padding."""
    if not shape:
        return itemsize
    s = list(shape)
    s[-1] = _round_up(s[-1], LANE)
    if len(s) >= 2:
        s[-2] = _round_up(s[-2], max(1, 32 // itemsize))
    return math.prod(s) * itemsize


def _apply_act(v, act):
    if act is None or str(act).lower() == "none":
        return v
    if act == "relu":
        return jnp.maximum(v, 0.0)
    if act == "gelu":
        return jax.nn.gelu(v)
    if act == "swish":
        return v * jax.nn.sigmoid(v)
    raise NotImplementedError(act)


# ---------------------------------------------------------------------------
# Fused kernel: in-VMEM im2col (lane concat of shifted taps) + deep GEMM +
# bias + activation for one (batch, Cout-tile, row-tile) grid cell.
# ---------------------------------------------------------------------------
def _make_convbn_kernel(*, K, stride, dilation, TR, TRC, Wo_p, Cin, groups,
                        resident, act, out_dtype, hint_rows):
    def kernel(x_ref, w_ref, b_ref, o_ref):
        # x_ref: (1, s, s, rows, Wq, Cin)   phase-split padded image (resident
        #                                   whole image, or halo row window)
        # w_ref: (K*K*Cin, Cout_tile)       resident repacked weights (bf16)
        # b_ref: (1, Cout_tile)             bias (f32)
        # o_ref: (TR*Wo_p, Cout_tile)       flat, lane-dense output tile
        if resident:
            h_base = pl.program_id(2) * TR
            if hint_rows:
                h_base = pl.multiple_of(h_base, 8)
        else:
            h_base = 0                       # halo block already starts at r*TR

        bias = b_ref[...]                    # (1, Cout_tile), hoisted

        for t0 in range(0, TR, TRC):         # static M-chunk loop
            rows = min(TRC, TR - t0)
            acc = None
            w_off = 0
            for g in groups:                 # static tap groups (deep contraction)
                pieces = []
                for (ky, kx) in g:
                    py, oy = (ky * dilation) % stride, (ky * dilation) // stride
                    px, ox = (kx * dilation) % stride, (kx * dilation) // stride
                    sl = x_ref[0, py, px,
                               pl.ds(h_base + (t0 + oy), rows),
                               pl.ds(ox, Wo_p), :]          # (rows, Wo_p, Cin)
                    pieces.append(sl)
                cat = pieces[0] if len(pieces) == 1 else jnp.concatenate(
                    pieces, axis=-1)                        # (rows, Wo_p, g*Cin)
                gck = len(g) * Cin
                lhs = cat.reshape(rows * Wo_p, gck)         # Wo_p-aligned merge
                part = jnp.dot(lhs, w_ref[pl.ds(w_off, gck), :],
                               preferred_element_type=jnp.float32)
                acc = part if acc is None else acc + part
                w_off += gck

            acc = _apply_act(acc + bias, act)               # f32 epilogue
            o_ref[pl.ds(t0 * Wo_p, rows * Wo_p), :] = acc.astype(out_dtype)

    return kernel


# ---------------------------------------------------------------------------
# ConvBN forward: act(norm(conv(x))) with norm=Identity.
# Public API stays NCHW-in / NCHW-out (PyTorch semantics).
# ---------------------------------------------------------------------------
def convbn_forward(x, weight, bias, *, stride=1, padding=0, dilation=1,
                   act="relu", compute_dtype=jnp.bfloat16, out_dtype=None,
                   rows_per_tile=None, vmem_budget_bytes=None, nchw_out=True):
    """x: (N, Cin, H, W); weight: (Cout, Cin, K, K); bias: (Cout,) or None."""
    N, Cin, H, W = x.shape
    Cout, Cin_w, KH, KW = weight.shape
    assert Cin_w == Cin and KH == KW, "square kernel, groups=1 only"
    K = KH
    s, d, p = int(stride), int(dilation), int(padding)

    cdt = jnp.dtype(compute_dtype)
    if out_dtype is None:
        out_dtype = compute_dtype          # bf16 store: half vst / HBM writeback
    out_dtype = jnp.dtype(out_dtype)

    Ho = (H + 2 * p - d * (K - 1) - 1) // s + 1
    Wo = (W + 2 * p - d * (K - 1) - 1) // s + 1
    assert Ho > 0 and Wo > 0

    wo_align = 16 if cdt.itemsize == 2 else 8     # sublane-aligned row merges
    Wo_p = _round_up(Wo, wo_align)
    Cout_pad = _round_up(Cout, LANE)              # lane-dense output channels
    Cout_tile = 256 if Cout_pad % 256 == 0 else LANE
    n_co = Cout_pad // Cout_tile

    max_o = (d * (K - 1)) // s                    # halo rows/cols in phase coords
    Wp_need = (Wo_p - 1) * s + d * (K - 1) + 1
    Wp_tot = _round_up(max(W + 2 * p, Wp_need), s)
    Wq = Wp_tot // s

    # Tap grouping: every dot gets contraction depth >= ~256 (or all K*K taps
    # folded into one dot when Cin*K*K is small).
    group_len = max(1, min(K * K, _cdiv(256, Cin)))
    tap_order = [(ky, kx) for ky in range(K) for kx in range(K)]
    groups = [tap_order[i:i + group_len] for i in range(0, K * K, group_len)]
    CKK = K * K * Cin
    max_gw = max(len(g) for g in groups) * Cin

    # ---- per-TensorCore VMEM budget (generation-aware, no blanket 64 MiB cap).
    if vmem_budget_bytes is None:
        try:
            cap = int(pltpu.get_tpu_info().vmem_capacity_bytes)
        except Exception:
            cap = 64 << 20                         # conservative (v7x-sized)
        vmem_budget_bytes = int(cap * 0.85)
    budget = int(vmem_budget_bytes)
    target_rows = 1024 if budget > (80 << 20) else 512   # smaller tiles on v7x

    def geom(tr):
        ho_pad = _round_up(Ho, tr)
        hp_need = (ho_pad - 1) * s + d * (K - 1) + 1
        hp_tot = _round_up(max(H + 2 * p, hp_need), s)
        return ho_pad, hp_tot, hp_tot // s

    def chunk_rows(tr):
        if len(groups) == 1 and tr * Wo_p <= 1024:
            return tr
        return max(1, min(tr, 512 // Wo_p if Wo_p <= 512 else 1))

    def estimate(tr, resident):
        _, _, hq = geom(tr)
        x_rows = hq if resident else (tr + max_o)
        xb = _vmem_bytes((s, s, x_rows, Wq, Cin), cdt.itemsize)
        wb = _vmem_bytes((CKK, Cout_tile), cdt.itemsize)
        bb = _vmem_bytes((1, Cout_tile), 4)
        ob = _vmem_bytes((tr * Wo_p, Cout_tile), out_dtype.itemsize)
        trc = chunk_rows(tr)
        lhs = _vmem_bytes((trc * Wo_p, max_gw), cdt.itemsize)
        acc = _vmem_bytes((trc * Wo_p, Cout_tile), 4)
        # pipelined blocks double-buffered; compute intermediates single.
        return 2 * (xb + wb + bb + ob) + 2 * lhs + acc + (2 << 20)

    user_tr = rows_per_tile is not None
    if user_tr:
        TR = max(1, min(int(rows_per_tile), Ho))
    else:
        TR = max(1, min(Ho, max(1, target_rows // Wo_p)))
        if TR >= 8:
            TR -= TR % 8
    # Prefer the whole phase-split padded image resident per batch element
    # (fetched from HBM exactly once per n); halo-tile rows when it won't fit.
    resident = estimate(TR, True) <= (budget * 3) // 4
    if not resident and not user_tr:
        while TR > 8 and estimate(TR, False) > budget:
            TR = max(8, TR // 2)

    Ho_pad, Hp_tot, Hq = geom(TR)
    n_rt = Ho_pad // TR
    TRC = chunk_rows(TR)
    vmem_limit = int(min(budget, max(32 << 20, int(estimate(TR, resident) * 1.25))))

    # ---- glue: NCHW -> NHWC, zero pad, space-to-phase split (unit-stride taps).
    # TODO(synk): for conv stacks keep activations NHWC / Cout-padded between
    # layers and skip this transpose + the final slice/transpose glue.
    x_nhwc = jnp.transpose(x, (0, 2, 3, 1)).astype(cdt)
    xp = jnp.pad(x_nhwc, ((0, 0), (p, Hp_tot - p - H), (p, Wp_tot - p - W), (0, 0)))
    x_ph = xp.reshape(N, Hq, s, Wq, s, Cin).transpose(0, 2, 4, 1, 3, 5)
    # x_ph[n, py, px, a, b, c] == xp[n, a*s + py, b*s + px, c]

    # Weights: (Cout, Cin, K, K) -> (K*K*Cin, Cout_pad) matching tap/lane order.
    w2 = jnp.transpose(weight, (2, 3, 1, 0)).reshape(CKK, Cout)
    w2 = jnp.pad(w2, ((0, 0), (0, Cout_pad - Cout))).astype(cdt)
    if bias is None:
        b2 = jnp.zeros((1, Cout_pad), jnp.float32)
    else:
        b2 = jnp.pad(bias.astype(jnp.float32),
                     (0, Cout_pad - Cout)).reshape(1, Cout_pad)

    kernel = _make_convbn_kernel(
        K=K, stride=s, dilation=d, TR=TR, TRC=TRC, Wo_p=Wo_p, Cin=Cin,
        groups=groups, resident=resident, act=act, out_dtype=out_dtype,
        hint_rows=(TR % 8 == 0))

    if resident:
        x_spec = pl.BlockSpec((1, s, s, Hq, Wq, Cin),
                              lambda n, co, r: (n, 0, 0, 0, 0, 0))
    else:
        # Halo row window: element offset r*TR on the phase-row axis, block
        # height TR + halo (overlapping input windows are fine).
        x_spec = pl.BlockSpec((1, s, s, pl.Element(TR + max_o), Wq, Cin),
                              lambda n, co, r: (n, 0, 0, r * TR, 0, 0))
    w_spec = pl.BlockSpec((CKK, Cout_tile), lambda n, co, r: (0, co))
    b_spec = pl.BlockSpec((1, Cout_tile), lambda n, co, r: (0, co))
    o_spec = pl.BlockSpec((None, TR * Wo_p, Cout_tile),
                          lambda n, co, r: (n, r, co))

    flops = 2 * N * Ho * Wo * K * K * Cin * Cout
    transc = N * Ho * Wo * Cout if act in ("gelu", "swish") else 0
    bytes_accessed = int(x_ph.size * cdt.itemsize + w2.size * cdt.itemsize
                         + b2.size * 4
                         + N * Ho_pad * Wo_p * Cout_pad * out_dtype.itemsize)

    out_flat = pl.pallas_call(
        kernel,
        out_shape=jax.ShapeDtypeStruct((N, Ho_pad * Wo_p, Cout_pad), out_dtype),
        grid_spec=pltpu.PrefetchScalarGridSpec(
            num_scalar_prefetch=0,
            grid=(N, n_co, n_rt),
            in_specs=[x_spec, w_spec, b_spec],
            out_specs=o_spec),
        compiler_params=pltpu.CompilerParams(
            dimension_semantics=("parallel", "parallel", "parallel"),
            vmem_limit_bytes=vmem_limit),
        cost_estimate=pl.CostEstimate(flops=flops, transcendentals=transc,
                                      bytes_accessed=bytes_accessed),
    )(x_ph, w2, b2)

    # Glue: un-flatten (free), drop row/col/channel padding, back to NCHW.
    out = out_flat.reshape(N, Ho_pad, Wo_p, Cout_pad)[:, :Ho, :Wo, :Cout]
    if nchw_out:
        out = jnp.transpose(out, (0, 3, 1, 2))
    return out


# ---------------------------------------------------------------------------
# Deterministic parameter init (matches nn.init.xavier_uniform_ / zeros_).
# ---------------------------------------------------------------------------
def init_convbn_params(key, in_channels, out_channels, kernel_size):
    fan_in = in_channels * kernel_size * kernel_size
    fan_out = out_channels * kernel_size * kernel_size
    bound = (6.0 / (fan_in + fan_out)) ** 0.5
    weight = jax.random.uniform(
        key, (out_channels, in_channels, kernel_size, kernel_size),
        dtype=jnp.float32, minval=-bound, maxval=bound)
    bias = jnp.zeros((out_channels,), dtype=jnp.float32)
    return weight, bias


if __name__ == "__main__":
    key = jax.random.PRNGKey(0)

    def reference(x, w, b, stride, padding, dilation):
        # XLA conv + bias + ReLU on the same bf16-rounded operands (kernel uses
        # bf16 MXU inputs with f32 accumulation).
        xq = x.astype(jnp.bfloat16).astype(jnp.float32)
        wq = w.astype(jnp.bfloat16).astype(jnp.float32)
        out = lax.conv_general_dilated(
            xq, wq, window_strides=(stride, stride),
            padding=((padding, padding), (padding, padding)),
            rhs_dilation=(dilation, dilation),
            dimension_numbers=("NCHW", "OIHW", "NCHW"),
            precision=lax.Precision.HIGHEST)
        return jnp.maximum(out + b.reshape(1, -1, 1, 1), 0.0)

    # --- ConvBN(4, 8, kernel_size=3, padding=1) on (2, 4, 16, 16), stride 1.
    N, Cin, H, W, Cout, K = 2, 4, 16, 16, 8, 3
    k_x, k_w, k_rest = jax.random.split(key, 3)
    x = jax.random.normal(k_x, (N, Cin, H, W), dtype=jnp.float32)
    weight, bias = init_convbn_params(k_w, Cin, Cout, K)

    fwd = jax.jit(functools.partial(convbn_forward, stride=1, padding=1,
                                    dilation=1, out_dtype=jnp.float32))
    out = jax.block_until_ready(fwd(x, weight, bias))
    ref = reference(x, weight, bias, 1, 1, 1)
    assert out.shape == ref.shape == (N, Cout, H, W), out.shape
    err = float(jnp.max(jnp.abs(out - ref)))
    assert jnp.allclose(out, ref, atol=1e-3, rtol=1e-3), f"stride1 max err {err}"

    # --- default bf16-output path (halves vst / HBM writeback).
    fwd16 = jax.jit(functools.partial(convbn_forward, stride=1, padding=1,
                                      dilation=1))
    out16 = jax.block_until_ready(fwd16(x, weight, bias)).astype(jnp.float32)
    assert jnp.allclose(out16, ref, atol=5e-2, rtol=5e-2), "bf16 out mismatch"

    # --- stride=2 path (space-to-phase split keeps in-kernel slices unit-stride).
    N2, Cin2, H2, W2, Cout2, K2 = 2, 8, 16, 16, 16, 3
    kx2, kw2, kb2 = jax.random.split(k_rest, 3)
    x2 = jax.random.normal(kx2, (N2, Cin2, H2, W2), dtype=jnp.float32)
    w2_, _ = init_convbn_params(kw2, Cin2, Cout2, K2)
    b2_ = 0.1 * jax.random.normal(kb2, (Cout2,), dtype=jnp.float32)
    fwd2 = jax.jit(functools.partial(convbn_forward, stride=2, padding=1,
                                     dilation=1, out_dtype=jnp.float32))
    out2 = jax.block_until_ready(fwd2(x2, w2_, b2_))
    ref2 = reference(x2, w2_, b2_, 2, 1, 1)
    assert out2.shape == ref2.shape, (out2.shape, ref2.shape)
    err2 = float(jnp.max(jnp.abs(out2 - ref2)))
    assert jnp.allclose(out2, ref2, atol=1e-3, rtol=1e-3), f"stride2 max err {err2}"

    print("KERNEL_OK")
</pallas_src>

<mosaic_0001>
module attributes {stable_mosaic.version = 11 : i64} {
  func.func @kernel(%arg0: i32, %arg1: i32, %arg2: i32, %arg3: memref<1x1x1x18x18x4xbf16, #tpu.memory_space<vmem>>, %arg4: memref<36x128xbf16, #tpu.memory_space<vmem>>, %arg5: memref<1x128xf32, #tpu.memory_space<vmem>>, %arg6: memref<1x256x128xf32, #tpu.memory_space<vmem>>) attributes {dimension_semantics = [#tpu.dimension_semantics<parallel>, #tpu.dimension_semantics<parallel>, #tpu.dimension_semantics<parallel>], iteration_bounds = array<i64: 2, 1, 1>, scalar_prefetch = 0 : i64, scratch_operands = 0 : i64, tpu.core_type = #tpu.core_type<tc>, window_params = [{transform_indices = @transform_0, window_bounds = array<i64: 1, 1, 1, 18, 18, 4>}, {transform_indices = @transform_1, window_bounds = array<i64: 36, 128>}, {transform_indices = @transform_2, window_bounds = array<i64: 1, 128>}, {transform_indices = @transform_3, window_bounds = array<i64: 1, 256, 128>}]} {
    %c16_i32 = arith.constant 16 : i32
    %0 = arith.muli %arg2, %c16_i32 : i32
    %1 = tpu.assume_multiple %0, 8 : i32
    %c0 = arith.constant 0 : index
    %c0_0 = arith.constant 0 : index
    %2 = vector.load %arg5[%c0, %c0_0] : memref<1x128xf32, #tpu.memory_space<vmem>>, vector<1x128xf32>
    %c0_i32 = arith.constant 0 : i32
    %3 = arith.addi %1, %c0_i32 : i32
    %c0_1 = arith.constant 0 : index
    %c0_2 = arith.constant 0 : index
    %c0_3 = arith.constant 0 : index
    %4 = arith.index_cast %3 : i32 to index
    %c0_4 = arith.constant 0 : index
    %c0_5 = arith.constant 0 : index
    %5 = vector.load %arg3[%c0_1, %c0_2, %c0_3, %4, %c0_4, %c0_5] : memref<1x1x1x18x18x4xbf16, #tpu.memory_space<vmem>>, vector<1x1x1x16x16x4xbf16>
    %6 = vector.shape_cast %5 : vector<1x1x1x16x16x4xbf16> to vector<16x16x4xbf16>
    %c0_i32_6 = arith.constant 0 : i32
    %7 = arith.addi %1, %c0_i32_6 : i32
    %c0_7 = arith.constant 0 : index
    %c0_8 = arith.constant 0 : index
    %c0_9 = arith.constant 0 : index
    %8 = arith.index_cast %7 : i32 to index
    %c1 = arith.constant 1 : index
    %c0_10 = arith.constant 0 : index
    %9 = vector.load %arg3[%c0_7, %c0_8, %c0_9, %8, %c1, %c0_10] : memref<1x1x1x18x18x4xbf16, #tpu.memory_space<vmem>>, vector<1x1x1x16x16x4xbf16>
    %10 = vector.shape_cast %9 : vector<1x1x1x16x16x4xbf16> to vector<16x16x4xbf16>
    %c0_i32_11 = arith.constant 0 : i32
    %11 = arith.addi %1, %c0_i32_11 : i32
    %c0_12 = arith.constant 0 : index
    %c0_13 = arith.constant 0 : index
    %c0_14 = arith.constant 0 : index
    %12 = arith.index_cast %11 : i32 to index
    %c2 = arith.constant 2 : index
    %c0_15 = arith.constant 0 : index
    %13 = vector.load %arg3[%c0_12, %c0_13, %c0_14, %12, %c2, %c0_15] : memref<1x1x1x18x18x4xbf16, #tpu.memory_space<vmem>>, vector<1x1x1x16x16x4xbf16>
    %14 = vector.shape_cast %13 : vector<1x1x1x16x16x4xbf16> to vector<16x16x4xbf16>
    %c1_i32 = arith.constant 1 : i32
    %15 = arith.addi %1, %c1_i32 : i32
    %c0_16 = arith.constant 0 : index
    %c0_17 = arith.constant 0 : index
    %c0_18 = arith.constant 0 : index
    %16 = arith.index_cast %15 : i32 to index
    %c0_19 = arith.constant 0 : index
    %c0_20 = arith.constant 0 : index
    %17 = vector.load %arg3[%c0_16, %c0_17, %c0_18, %16, %c0_19, %c0_20] : memref<1x1x1x18x18x4xbf16, #tpu.memory_space<vmem>>, vector<1x1x1x16x16x4xbf16>
    %18 = vector.shape_cast %17 : vector<1x1x1x16x16x4xbf16> to vector<16x16x4xbf16>
    %c1_i32_21 = arith.constant 1 : i32
    %19 = arith.addi %1, %c1_i32_21 : i32
    %c0_22 = arith.constant 0 : index
    %c0_23 = arith.constant 0 : index
    %c0_24 = arith.constant 0 : index
    %20 = arith.index_cast %19 : i32 to index
    %c1_25 = arith.constant 1 : index
    %c0_26 = arith.constant 0 : index
    %21 = vector.load %arg3[%c0_22, %c0_23, %c0_24, %20, %c1_25, %c0_26] : memref<1x1x1x18x18x4xbf16, #tpu.memory_space<vmem>>, vector<1x1x1x16x16x4xbf16>
    %22 = vector.shape_cast %21 : vector<1x1x1x16x16x4xbf16> to vector<16x16x4xbf16>
    %c1_i32_27 = arith.constant 1 : i32
    %23 = arith.addi %1, %c1_i32_27 : i32
    %c0_28 = arith.constant 0 : index
    %c0_29 = arith.constant 0 : index
    %c0_30 = arith.constant 0 : index
    %24 = arith.index_cast %23 : i32 to index
    %c2_31 = arith.constant 2 : index
    %c0_32 = arith.constant 0 : index
    %25 = vector.load %arg3[%c0_28, %c0_29, %c0_30, %24, %c2_31, %c0_32] : memref<1x1x1x18x18x4xbf16, #tpu.memory_space<vmem>>, vector<1x1x1x16x16x4xbf16>
    %26 = vector.shape_cast %25 : vector<1x1x1x16x16x4xbf16> to vector<16x16x4xbf16>
    %c2_i32 = arith.constant 2 : i32
    %27 = arith.addi %1, %c2_i32 : i32
    %c0_33 = arith.constant 0 : index
    %c0_34 = arith.constant 0 : index
    %c0_35 = arith.constant 0 : index
    %28 = arith.index_cast %27 : i32 to index
    %c0_36 = arith.constant 0 : index
    %c0_37 = arith.constant 0 : index
    %29 = vector.load %arg3[%c0_33, %c0_34, %c0_35, %28, %c0_36, %c0_37] : memref<1x1x1x18x18x4xbf16, #tpu.memory_space<vmem>>, vector<1x1x1x16x16x4xbf16>
    %30 = vector.shape_cast %29 : vector<1x1x1x16x16x4xbf16> to vector<16x16x4xbf16>
    %c2_i32_38 = arith.constant 2 : i32
    %31 = arith.addi %1, %c2_i32_38 : i32
    %c0_39 = arith.constant 0 : index
    %c0_40 = arith.constant 0 : index
    %c0_41 = arith.constant 0 : index
    %32 = arith.index_cast %31 : i32 to index
    %c1_42 = arith.constant 1 : index
    %c0_43 = arith.constant 0 : index
    %33 = vector.load %arg3[%c0_39, %c0_40, %c0_41, %32, %c1_42, %c0_43] : memref<1x1x1x18x18x4xbf16, #tpu.memory_space<vmem>>, vector<1x1x1x16x16x4xbf16>
    %34 = vector.shape_cast %33 : vector<1x1x1x16x16x4xbf16> to vector<16x16x4xbf16>
    %c2_i32_44 = arith.constant 2 : i32
    %35 = arith.addi %1, %c2_i32_44 : i32
    %c0_45 = arith.constant 0 : index
    %c0_46 = arith.constant 0 : index
    %c0_47 = arith.constant 0 : index
    %36 = arith.index_cast %35 : i32 to index
    %c2_48 = arith.constant 2 : index
    %c0_49 = arith.constant 0 : index
    %37 = vector.load %arg3[%c0_45, %c0_46, %c0_47, %36, %c2_48, %c0_49] : memref<1x1x1x18x18x4xbf16, #tpu.memory_space<vmem>>, vector<1x1x1x16x16x4xbf16>
    %38 = vector.shape_cast %37 : vector<1x1x1x16x16x4xbf16> to vector<16x16x4xbf16>
    %39 = tpu.concatenate %6, %10, %14, %18, %22, %26, %30, %34, %38 in 2 : vector<16x16x4xbf16>, vector<16x16x4xbf16>, vector<16x16x4xbf16>, vector<16x16x4xbf16>, vector<16x16x4xbf16>, vector<16x16x4xbf16>, vector<16x16x4xbf16>, vector<16x16x4xbf16>, vector<16x16x4xbf16> -> vector<16x16x36xbf16>
    %40 = vector.shape_cast %39 : vector<16x16x36xbf16> to vector<256x36xbf16>
    %c0_50 = arith.constant 0 : index
    %c0_51 = arith.constant 0 : index
    %41 = vector.load %arg4[%c0_50, %c0_51] : memref<36x128xbf16, #tpu.memory_space<vmem>>, vector<36x128xbf16>
    %cst = arith.constant dense<0.000000e+00> : vector<256x128xf32>
    %42 = tpu.matmul %40, %41, %cst {dimension_numbers = #tpu.dot_dimension_numbers<[1], [0], [0], [1], [0, 0, 1, 1], [], []>} : vector<256x36xbf16>, vector<36x128xbf16>, vector<256x128xf32> -> vector<256x128xf32>
    %43 = vector.broadcast %2 : vector<1x128xf32> to vector<256x128xf32>
    %44 = arith.addf %42, %43 : vector<256x128xf32>
    %cst_52 = arith.constant 0.000000e+00 : f32
    %45 = vector.broadcast %cst_52 : f32 to vector<256x128xf32>
    %46 = arith.maximumf %44, %45 : vector<256x128xf32>
    %c0_53 = arith.constant 0 : index
    %c0_54 = arith.constant 0 : index
    %c0_55 = arith.constant 0 : index
    %47 = vector.load %arg6[%c0_53, %c0_54, %c0_55] : memref<1x256x128xf32, #tpu.memory_space<vmem>>, vector<1x256x128xf32>
    %48 = vector.shape_cast %47 : vector<1x256x128xf32> to vector<256x128xf32>
    %49 = vector.shape_cast %46 : vector<256x128xf32> to vector<1x256x128xf32>
    tpu.vector_store %arg6[%c0_53, %c0_54, %c0_55], %49 {strides = array<i32>} : memref<1x256x128xf32, #tpu.memory_space<vmem>>, vector<1x256x128xf32>,
    return
  }
  func.func @transform_0(%arg0: i32, %arg1: i32, %arg2: i32) -> (i32, i32, i32, i32, i32, i32) {
    %c0_i32 = arith.constant 0 : i32
    %c0_i32_0 = arith.constant 0 : i32
    %c0_i32_1 = arith.constant 0 : i32
    %c0_i32_2 = arith.constant 0 : i32
    %c0_i32_3 = arith.constant 0 : i32
    %c0_i32_4 = arith.constant 0 : i32
    return %arg0, %c0_i32, %c0_i32_0, %c0_i32_1, %c0_i32_2, %c0_i32_3 : i32, i32, i32, i32, i32, i32
  }
  func.func @transform_1(%arg0: i32, %arg1: i32, %arg2: i32) -> (i32, i32) {
    %c0_i32 = arith.constant 0 : i32
    %c0_i32_0 = arith.constant 0 : i32
    return %c0_i32, %arg1 : i32, i32
  }
  func.func @transform_2(%arg0: i32, %arg1: i32, %arg2: i32) -> (i32, i32) {
    %c0_i32 = arith.constant 0 : i32
    %c0_i32_0 = arith.constant 0 : i32
    return %c0_i32, %arg1 : i32, i32
  }
  func.func @transform_3(%arg0: i32, %arg1: i32, %arg2: i32) -> (i32, i32, i32) {
    %c0_i32 = arith.constant 0 : i32
    return %arg0, %arg2, %arg1 : i32, i32, i32
  }
}

</mosaic_0001>

<llo_original>
// kernel: convbn_forward.1
$region0: #{convbn_forward.1}
  #allocation0 [shape = 'u32[]', space=smem, size = 0x4, offset = 0x4, fixed_abs, tag = 'smem constant byte address 0x4 - core index']
  #allocation1 [shape = 'u32[144,128]{1,0:T(1,128)}', space=vmem, size = 0x12000, scoped, tag = 'internal scratch']
  %s0 = inlined_call_operand.vmem [shape: bf16[2,1,1,18,18,4], index: 0, kind: input, shape index: {}]
  %s1 = inlined_call_operand.vmem [shape: bf16[36,128], index: 1, kind: input, shape index: {}]
  %s2 = inlined_call_operand.vmem [shape: f32[1,128], index: 2, kind: input, shape index: {}]
  %s3 = inlined_call_operand.vmem [shape: f32[2,256,128], index: 3, kind: output, shape index: {}]
  %s4 = sld [smem:[#allocation0]]
  $region45: #{convbn_forward.1} parent=0
    _
  %s6 = ssub.s32 1, %s4
  %s7 = scalar_select 0, %s6, %s4
  loop: start=0, step=1, limit=4
  $region2: #{convbn_forward.1} parent=0 // loop_pre_header
    _
  $region3: #{convbn_forward.1} parent=0 // loop_header
    %s9 = sphi 0, %s13
    %p10 = scmp.ge.s32.totalorder %s9, 4
    %s16 = sphi 0, %s35
    %s17 = sphi 0, %s31
    %s18 = sphi 0, %s27
    %s19 = sphi 0, %s16
    %s20 = sphi 0, %s17
    %s21 = sphi 0, %s18
    %s22 = sphi 0, %s19
    %s23 = sphi 0, %s20
    %s24 = sphi 0, %s21
    %s38 = sphi 0, %s40
    %s41 = sphi 0, %s38
    %s42 = sphi 0, %s41
    %s58 = sphi 0, %s42
    %s64 = sphi 0, %s66
    %s67 = sphi 0, %s64
    %s68 = sphi 0, %s67
    %s84 = sphi 0, %s68
    %s90 = sphi 0, %s92
    %s93 = sphi 0, %s90
    %s94 = sphi 0, %s93
    %s110 = sphi 0, %s94
    %s120 = sphi 0, %s122
    %s123 = sphi 0, %s120
    %s124 = sphi 0, %s123
    %s140 = sphi 0, %s124
  $region4: #{convbn_forward.1} parent=0 // loop_header_branch
    %12 = sbr.rel (%p10) target = $region8
  $region5: #{convbn_forward.1} parent=0 // loop_body
    %s14 = ssub.s32 %s9, 1
    %s15 = ssub.s32 %s9, 2
    %s25 = sadd.s32 1, %s18
    %p26 = scmp.ge.s32.totalorder %s25, 1
    %s27 = scalar_select %p26, 0, %s25
    %s28 = sadd.s32 1, %s17
    %s29 = scalar_select %p26, %s28, %s17
    %p30 = scmp.ge.s32.totalorder %s29, 1
    %s31 = scalar_select %p30, 0, %s29
    %s32 = sadd.s32 1, %s16
    %s33 = scalar_select %p30, %s32, %s16
    %p34 = scmp.ge.s32.totalorder %s33, 2
    %s35 = scalar_select %p34, 0, %s33
    %s36 = ssub.s32 %s16, %s35
    %p37 = scmp.eq.s32.totalorder %s36, 0
    %s39 = sadd.s32 %s38, 1
    %s40 = scalar_select %p37, %s38, %s39
    %p43 = pneg %p37
    %p44 = scmp.eq.s32.totalorder %s9, 1
    %p45 = por %p43, %p44
    %p46 = scmp.ne.s32.totalorder %s38, %s41
    %p47 = scmp.eq.s32.totalorder %s9, 0
    %p48 = por %p46, %p47
    %p49 = scmp.ne.s32.totalorder %s38, %s41
    %p50 = scmp.eq.s32.totalorder %s14, 1
    %p51 = por %p49, %p50
    %p52 = scmp.ne.s32.totalorder %s41, %s42
    %p53 = scmp.eq.s32.totalorder %s14, 0
    %p54 = por %p52, %p53
    %p55 = scmp.ne.s32.totalorder %s41, %s42
    %p56 = scmp.eq.s32.totalorder %s15, 1
    %p57 = por %p55, %p56
    %p59 = scmp.ne.s32.totalorder %s42, %s58
    %p60 = scmp.eq.s32.totalorder %s15, 0
    %p61 = por %p59, %p60
    %s62 = ssub.s32 %s17, %s31
    %p63 = scmp.eq.s32.totalorder %s62, 0
    %s65 = sadd.s32 %s64, 1
    %s66 = scalar_select %p63, %s64, %s65
    %p69 = pneg %p63
    %p70 = scmp.eq.s32.totalorder %s9, 1
    %p71 = por %p69, %p70
    %p72 = scmp.ne.s32.totalorder %s64, %s67
    %p73 = scmp.eq.s32.totalorder %s9, 0
    %p74 = por %p72, %p73
    %p75 = scmp.ne.s32.totalorder %s64, %s67
    %p76 = scmp.eq.s32.totalorder %s14, 1
    %p77 = por %p75, %p76
    %p78 = scmp.ne.s32.totalorder %s67, %s68
    %p79 = scmp.eq.s32.totalorder %s14, 0
    %p80 = por %p78, %p79
    %p81 = scmp.ne.s32.totalorder %s67, %s68
    %p82 = scmp.eq.s32.totalorder %s15, 1
    %p83 = por %p81, %p82
    %p85 = scmp.ne.s32.totalorder %s68, %s84
    %p86 = scmp.eq.s32.totalorder %s15, 0
    %p87 = por %p85, %p86
    %s88 = ssub.s32 %s17, %s31
    %p89 = scmp.eq.s32.totalorder %s88, 0
    %s91 = sadd.s32 %s90, 1
    %s92 = scalar_select %p89, %s90, %s91
    %p95 = pneg %p89
    %p96 = scmp.eq.s32.totalorder %s9, 1
    %p97 = por %p95, %p96
    %p98 = scmp.ne.s32.totalorder %s90, %s93
    %p99 = scmp.eq.s32.totalorder %s9, 0
    %p100 = por %p98, %p99
    %p101 = scmp.ne.s32.totalorder %s90, %s93
    %p102 = scmp.eq.s32.totalorder %s14, 1
    %p103 = por %p101, %p102
    %p104 = scmp.ne.s32.totalorder %s93, %s94
    %p105 = scmp.eq.s32.totalorder %s14, 0
    %p106 = por %p104, %p105
    %p107 = scmp.ne.s32.totalorder %s93, %s94
    %p108 = scmp.eq.s32.totalorder %s15, 1
    %p109 = por %p107, %p108
    %p111 = scmp.ne.s32.totalorder %s94, %s110
    %p112 = scmp.eq.s32.totalorder %s15, 0
    %p113 = por %p111, %p112
    %s114 = ssub.s32 %s16, %s35
    %s115 = ssub.s32 %s18, %s27
    %s116 = sor.u32 %s114, %s115
    %s117 = ssub.s32 %s17, %s31
    %s118 = sor.u32 %s116, %s117
    %p119 = scmp.eq.s32.totalorder %s118, 0
    %s121 = sadd.s32 %s120, 1
    %s122 = scalar_select %p119, %s120, %s121
    %p125 = pneg %p119
    %p126 = scmp.eq.s32.totalorder %s9, 1
    %p127 = por %p125, %p126
    %p128 = scmp.ne.s32.totalorder %s120, %s123
    %p129 = scmp.eq.s32.totalorder %s9, 0
    %p130 = por %p128, %p129
    %p131 = scmp.ne.s32.totalorder %s120, %s123
    %p132 = scmp.eq.s32.totalorder %s14, 1
    %p133 = por %p131, %p132
    %p134 = scmp.ne.s32.totalorder %s123, %s124
    %p135 = scmp.eq.s32.totalorder %s14, 0
    %p136 = por %p134, %p135
    %p137 = scmp.ne.s32.totalorder %s123, %s124
    %p138 = scmp.eq.s32.totalorder %s15, 1
    %p139 = por %p137, %p138
    %p141 = scmp.ne.s32.totalorder %s124, %s140
    %p142 = scmp.eq.s32.totalorder %s15, 0
    %p143 = por %p141, %p142
    %p144 = scmp.le.s32.totalorder 1, %s9
    %p145 = scmp.lt.s32.totalorder %s9, 3
    %p146 = pnand %p144, %p145
    %p147 = pneg %p146
    // Predicated region
    $region9: #{convbn_forward.1} parent=5 // pred_check
      _
    $region10: #{convbn_forward.1} parent=5 // pred_check_branch
      %149 = sbr.rel (%p146) target = $region12
    $region11: #{convbn_forward.1} parent=5 // pred_region
      %s150 = ssub.s32 %s9, 1
      // Predicated region
      $region13: #{convbn_forward.1} parent=11 // pred_check
        %p151 = pneg %p80
      $region14: #{convbn_forward.1} parent=11 // pred_check_branch
        %153 = sbr.rel (%p151) target = $region16
      $region15: #{convbn_forward.1} parent=11 // pred_region
        %p154 = scmp.lt.s32.totalorder %s20, 0
        %s155 = scalar_select %p154, %s20, 0
        %s156 = smul.addr %s155, 4
        %s157 = scalar_lea.vmem %s1, %s156
      $region16: #{convbn_forward.1} parent=11 // pred_fallthru
        _
      // Predicated region
      $region17: #{convbn_forward.1} parent=11 // pred_check
        %p158 = pneg %p106
      $region18: #{convbn_forward.1} parent=11 // pred_check_branch
        %160 = sbr.rel (%p158) target = $region20
      $region19: #{convbn_forward.1} parent=11 // pred_region
        %p161 = scmp.lt.s32.totalorder %s20, 0
        %s162 = scalar_select %p161, %s20, 0
        %s163 = scalar_lea.vmem %s2, %s162
      $region20: #{convbn_forward.1} parent=11 // pred_fallthru
        _
    $region12: #{convbn_forward.1} parent=5 // pred_fallthru
      _
    %p164 = scmp.lt.s32.totalorder %s9, 2
    // Predicated region
    $region21: #{convbn_forward.1} parent=5 // pred_check
      %p165 = pneg %p164
    $region22: #{convbn_forward.1} parent=5 // pred_check_branch
      %167 = sbr.rel (%p165) target = $region24
    $region23: #{convbn_forward.1} parent=5 // pred_region
      // Predicated region
      $region25: #{convbn_forward.1} parent=23 // pred_check
        %p168 = pneg %p48
      $region26: #{convbn_forward.1} parent=23 // pred_check_branch
        %170 = sbr.rel (%p168) target = $region28
      $region27: #{convbn_forward.1} parent=23 // pred_region
        %p171 = scmp.lt.s32.totalorder %s16, 1
        %s172 = scalar_select %p171, %s16, 1
        %s173 = smul.addr %s172, 54
        %s174 = smul.addr %s173, 4
        %s175 = scalar_lea.vmem %s0, %s174
      $region28: #{convbn_forward.1} parent=23 // pred_fallthru
        _
    $region24: #{convbn_forward.1} parent=5 // pred_fallthru
      _
    %p176 = scmp.le.s32.totalorder 1, %s9
    %p177 = scmp.lt.s32.totalorder %s9, 3
    %p178 = pnand %p176, %p177
    %p179 = pneg %p178
    // Predicated region
    $region29: #{convbn_forward.1} parent=5 // pred_check
      _
    $region30: #{convbn_forward.1} parent=5 // pred_check_branch
      %181 = sbr.rel (%p178) target = $region32
    $region31: #{convbn_forward.1} parent=5 // pred_region
      %s182 = ssub.s32 %s9, 1
      %p183 = scmp.lt.s32.totalorder %s19, 1
      %s184 = scalar_select %p183, %s19, 1
      %s185 = smul.addr %s184, 54
      %s186 = smul.addr %s185, 4
      %s187 = scalar_lea.vmem %s0, %s186
      %p188 = pneg %p54
      %p189 = pneg %p51
      %p190 = scmp.lt.s32.totalorder %s20, 0
      %s191 = scalar_select %p190, %s20, 0
      %s192 = smul.addr %s191, 4
      %s193 = scalar_lea.vmem %s1, %s192
      %p194 = pneg %p80
      %p195 = pneg %p77
      %p196 = scmp.lt.s32.totalorder %s20, 0
      %s197 = scalar_select %p196, %s20, 0
      %s198 = scalar_lea.vmem %s2, %s197
      %p199 = pneg %p106
      %p200 = pneg %p103
      %p201 = pneg %p136
      %p202 = pneg %p133
      %s203 = smul.u32 32, %s21
      %p204 = scmp.lt.s32.totalorder %s19, 1
      %s205 = scalar_select %p204, %s19, 1
      %p206 = scmp.lt.s32.totalorder %s203, 31
      %s207 = scalar_select %p206, %s203, 31
      %p208 = scmp.lt.s32.totalorder %s20, 0
      %s209 = scalar_select %p208, %s20, 0
      %s210 = sadd.s32 %s209, %s207
      %s211 = smul.addr %s205, 32
      %s212 = sadd.s32 %s210, %s211
      %s213 = smul.addr %s212, 8
      %s214 = scalar_lea.vmem %s3, %s213
      %p215 = scmp.lt.s32.totalorder %s19, 1
      %s216 = scalar_select %p215, %s19, 1
      %s217 = smul.addr %s216, 54
      %s218 = smul.addr %s217, 4
      %s219 = scalar_lea.vmem %s0, %s218
      %p220 = scmp.lt.s32.totalorder %s20, 0
      %s221 = scalar_select %p220, %s20, 0
      %s222 = smul.addr %s221, 4
      %s223 = scalar_lea.vmem %s1, %s222
      %p224 = scmp.lt.s32.totalorder %s20, 0
      %s225 = scalar_select %p224, %s20, 0
      %s226 = scalar_lea.vmem %s2, %s225
      %s227 = smul.u32 32, %s21
      %p228 = scmp.lt.s32.totalorder %s19, 1
      %s229 = scalar_select %p228, %s19, 1
      %p230 = scmp.lt.s32.totalorder %s227, 31
      %s231 = scalar_select %p230, %s227, 31
      %p232 = scmp.lt.s32.totalorder %s20, 0
      %s233 = scalar_select %p232, %s20, 0
      %s234 = sadd.s32 %s233, %s231
      %s235 = smul.addr %s229, 32
      %s236 = sadd.s32 %s234, %s235
      %s237 = smul.addr %s236, 8
      %s238 = scalar_lea.vmem %s3, %s237
      %s239 = smul.u32 32, %s21
      %s241 = smul.u32 %s21, 16
      %v242 = vld [vmem:[%s226] sm:$0x1]
      %s243 = smul.u32 %s241, 3
      %s244 = smul.addr %s243, 4
      %s245 = scalar_lea.vmem %s219, %s244
      %v246 = vld [vmem:[%s245] sm:$0xf]
      %v247 = vld [vmem:[%s245 + $0x4] sm:$0xf]
      %v248 = vld [vmem:[%s245 + $0xc] sm:$0xf]
      %v249 = vld [vmem:[%s245 + $0x10] sm:$0xf]
      %v250 = vld [vmem:[%s245 + $0x18] sm:$0xf]
      %v251 = vld [vmem:[%s245 + $0x1c] sm:$0xf]
      %v252 = vld [vmem:[%s245 + $0x24] sm:$0xf]
      %v253 = vld [vmem:[%s245 + $0x28] sm:$0xf]
      %v254 = vld [vmem:[%s245 + $0x30] sm:$0xf]
      %v255 = vld [vmem:[%s245 + $0x34] sm:$0xf]
      %v256 = vld [vmem:[%s245 + $0x3c] sm:$0xf]
      %v257 = vld [vmem:[%s245 + $0x40] sm:$0xf]
      %v258 = vld [vmem:[%s245 + $0x48] sm:$0xf]
      %v259 = vld [vmem:[%s245 + $0x4c] sm:$0xf]
      %v260 = vld [vmem:[%s245 + $0x54] sm:$0xf]
      %v261 = vld [vmem:[%s245 + $0x58] sm:$0xf]
      %v262 = vld [vmem:[%s245 + $0x60] sm:$0xf]
      %v263 = vld [vmem:[%s245 + $0x64] sm:$0xf]
      %v264 = vld [vmem:[%s245 + $0x6c] sm:$0xf]
      %v265 = vld [vmem:[%s245 + $0x70] sm:$0xf]
      %v266 = vld [vmem:[%s245 + $0x78] sm:$0xf]
      %v267 = vld [vmem:[%s245 + $0x7c] sm:$0xf]
      %v268 = vld [vmem:[%s245 + $0x84] sm:$0xf]
      %v269 = vld [vmem:[%s245 + $0x88] sm:$0xf]
      %v270 = vld [vmem:[%s245 + $0x90] sm:$0xf]
      %v271 = vld [vmem:[%s245 + $0x94] sm:$0xf]
      %v272 = vld [vmem:[%s245 + $0x9c] sm:$0xf]
      %v273 = vld [vmem:[%s245 + $0xa0] sm:$0xf]
      %v274 = vld [vmem:[%s245 + $0xa8] sm:$0xf]
      %v275 = vld [vmem:[%s245 + $0xac] sm:$0xf]
      %v276 = vld [vmem:[%s245 + $0xb4] sm:$0xf]
      %v277 = vld [vmem:[%s245 + $0xb8] sm:$0xf]
      %v278 = vld [vmem:[%s245 + $0x8] sm:$0x1]
      %v279 = vld [vmem:[%s245 + $0x14] sm:$0x1]
      %v280 = vld [vmem:[%s245 + $0x20] sm:$0x1]
      %v281 = vld [vmem:[%s245 + $0x2c] sm:$0x1]
      %v282 = vld [vmem:[%s245 + $0x38] sm:$0x1]
      %v283 = vld [vmem:[%s245 + $0x44] sm:$0x1]
      %v284 = vld [vmem:[%s245 + $0x50] sm:$0x1]
      %v285 = vld [vmem:[%s245 + $0x5c] sm:$0x1]
      %v286 = vld [vmem:[%s245 + $0x68] sm:$0x1]
      %v287 = vld [vmem:[%s245 + $0x74] sm:$0x1]
      %v288 = vld [vmem:[%s245 + $0x80] sm:$0x1]
      %v289 = vld [vmem:[%s245 + $0x8c] sm:$0x1]
      %v290 = vld [vmem:[%s245 + $0x98] sm:$0x1]
      %v291 = vld [vmem:[%s245 + $0xa4] sm:$0x1]
      %v292 = vld [vmem:[%s245 + $0xb0] sm:$0x1]
      %v293 = vld [vmem:[%s245 + $0xbc] sm:$0x1]
      %v294 = vld [vmem:[%s245] sm:$0xe]
      %v295 = vld [vmem:[%s245 + $0xc] sm:$0xe]
      %v296 = vld [vmem:[%s245 + $0x18] sm:$0xe]
      %v297 = vld [vmem:[%s245 + $0x24] sm:$0xe]
      %v298 = vld [vmem:[%s245 + $0x30] sm:$0xe]
      %v299 = vld [vmem:[%s245 + $0x3c] sm:$0xe]
      %v300 = vld [vmem:[%s245 + $0x48] sm:$0xe]
      %v301 = vld [vmem:[%s245 + $0x54] sm:$0xe]
      %v302 = vld [vmem:[%s245 + $0x60] sm:$0xe]
      %v303 = vld [vmem:[%s245 + $0x6c] sm:$0xe]
      %v304 = vld [vmem:[%s245 + $0x78] sm:$0xe]
      %v305 = vld [vmem:[%s245 + $0x84] sm:$0xe]
      %v306 = vld [vmem:[%s245 + $0x90] sm:$0xe]
      %v307 = vld [vmem:[%s245 + $0x9c] sm:$0xe]
      %v308 = vld [vmem:[%s245 + $0xa8] sm:$0xe]
      %v309 = vld [vmem:[%s245 + $0xb4] sm:$0xe]
      %s310 = sadd.s32 %s241, 1
      %s311 = smul.u32 %s310, 3
      %s312 = smul.addr %s311, 4
      %s313 = scalar_lea.vmem %s219, %s312
      %v314 = vld [vmem:[%s313] sm:$0xf]
      %v315 = vld [vmem:[%s313 + $0x4] sm:$0xf]
      %v316 = vld [vmem:[%s313 + $0xc] sm:$0xf]
      %v317 = vld [vmem:[%s313 + $0x10] sm:$0xf]
      %v318 = vld [vmem:[%s313 + $0x18] sm:$0xf]
      %v319 = vld [vmem:[%s313 + $0x1c] sm:$0xf]
      %v320 = vld [vmem:[%s313 + $0x24] sm:$0xf]
      %v321 = vld [vmem:[%s313 + $0x28] sm:$0xf]
      %v322 = vld [vmem:[%s313 + $0x30] sm:$0xf]
      %v323 = vld [vmem:[%s313 + $0x34] sm:$0xf]
      %v324 = vld [vmem:[%s313 + $0x3c] sm:$0xf]
      %v325 = vld [vmem:[%s313 + $0x40] sm:$0xf]
      %v326 = vld [vmem:[%s313 + $0x48] sm:$0xf]
      %v327 = vld [vmem:[%s313 + $0x4c] sm:$0xf]
      %v328 = vld [vmem:[%s313 + $0x54] sm:$0xf]
      %v329 = vld [vmem:[%s313 + $0x58] sm:$0xf]
      %v330 = vld [vmem:[%s313 + $0x60] sm:$0xf]
      %v331 = vld [vmem:[%s313 + $0x64] sm:$0xf]
      %v332 = vld [vmem:[%s313 + $0x6c] sm:$0xf]
      %v333 = vld [vmem:[%s313 + $0x70] sm:$0xf]
      %v334 = vld [vmem:[%s313 + $0x78] sm:$0xf]
      %v335 = vld [vmem:[%s313 + $0x7c] sm:$0xf]
      %v336 = vld [vmem:[%s313 + $0x84] sm:$0xf]
      %v337 = vld [vmem:[%s313 + $0x88] sm:$0xf]
      %v338 = vld [vmem:[%s313 + $0x90] sm:$0xf]
      %v339 = vld [vmem:[%s313 + $0x94] sm:$0xf]
      %v340 = vld [vmem:[%s313 + $0x9c] sm:$0xf]
      %v341 = vld [vmem:[%s313 + $0xa0] sm:$0xf]
      %v342 = vld [vmem:[%s313 + $0xa8] sm:$0xf]
      %v343 = vld [vmem:[%s313 + $0xac] sm:$0xf]
      %v344 = vld [vmem:[%s313 + $0xb4] sm:$0xf]
      %v345 = vld [vmem:[%s313 + $0xb8] sm:$0xf]
      %v346 = vld [vmem:[%s313 + $0x8] sm:$0x1]
      %v347 = vld [vmem:[%s313 + $0x14] sm:$0x1]
      %v348 = vld [vmem:[%s313 + $0x20] sm:$0x1]
      %v349 = vld [vmem:[%s313 + $0x2c] sm:$0x1]
      %v350 = vld [vmem:[%s313 + $0x38] sm:$0x1]
      %v351 = vld [vmem:[%s313 + $0x44] sm:$0x1]
      %v352 = vld [vmem:[%s313 + $0x50] sm:$0x1]
      %v353 = vld [vmem:[%s313 + $0x5c] sm:$0x1]
      %v354 = vld [vmem:[%s313 + $0x68] sm:$0x1]
      %v355 = vld [vmem:[%s313 + $0x74] sm:$0x1]
      %v356 = vld [vmem:[%s313 + $0x80] sm:$0x1]
      %v357 = vld [vmem:[%s313 + $0x8c] sm:$0x1]
      %v358 = vld [vmem:[%s313 + $0x98] sm:$0x1]
      %v359 = vld [vmem:[%s313 + $0xa4] sm:$0x1]
      %v360 = vld [vmem:[%s313 + $0xb0] sm:$0x1]
      %v361 = vld [vmem:[%s313 + $0xbc] sm:$0x1]
      %v362 = vld [vmem:[%s313] sm:$0xe]
      %v363 = vld [vmem:[%s313 + $0xc] sm:$0xe]
      %v364 = vld [vmem:[%s313 + $0x18] sm:$0xe]
      %v365 = vld [vmem:[%s313 + $0x24] sm:$0xe]
      %v366 = vld [vmem:[%s313 + $0x30] sm:$0xe]
      %v367 = vld [vmem:[%s313 + $0x3c] sm:$0xe]
      %v368 = vld [vmem:[%s313 + $0x48] sm:$0xe]
      %v369 = vld [vmem:[%s313 + $0x54] sm:$0xe]
      %v370 = vld [vmem:[%s313 + $0x60] sm:$0xe]
      %v371 = vld [vmem:[%s313 + $0x6c] sm:$0xe]
      %v372 = vld [vmem:[%s313 + $0x78] sm:$0xe]
      %v373 = vld [vmem:[%s313 + $0x84] sm:$0xe]
      %v374 = vld [vmem:[%s313 + $0x90] sm:$0xe]
      %v375 = vld [vmem:[%s313 + $0x9c] sm:$0xe]
      %v376 = vld [vmem:[%s313 + $0xa8] sm:$0xe]
      %v377 = vld [vmem:[%s313 + $0xb4] sm:$0xe]
      %s378 = sadd.s32 %s241, 2
      %s379 = smul.u32 %s378, 3
      %s380 = smul.addr %s379, 4
      %s381 = scalar_lea.vmem %s219, %s380
      %v382 = vld [vmem:[%s381] sm:$0xf]
      %v383 = vld [vmem:[%s381 + $0x4] sm:$0xf]
      %v384 = vld [vmem:[%s381 + $0xc] sm:$0xf]
      %v385 = vld [vmem:[%s381 + $0x10] sm:$0xf]
      %v386 = vld [vmem:[%s381 + $0x18] sm:$0xf]
      %v387 = vld [vmem:[%s381 + $0x1c] sm:$0xf]
      %v388 = vld [vmem:[%s381 + $0x24] sm:$0xf]
      %v389 = vld [vmem:[%s381 + $0x28] sm:$0xf]
      %v390 = vld [vmem:[%s381 + $0x30] sm:$0xf]
      %v391 = vld [vmem:[%s381 + $0x34] sm:$0xf]
      %v392 = vld [vmem:[%s381 + $0x3c] sm:$0xf]
      %v393 = vld [vmem:[%s381 + $0x40] sm:$0xf]
      %v394 = vld [vmem:[%s381 + $0x48] sm:$0xf]
      %v395 = vld [vmem:[%s381 + $0x4c] sm:$0xf]
      %v396 = vld [vmem:[%s381 + $0x54] sm:$0xf]
      %v397 = vld [vmem:[%s381 + $0x58] sm:$0xf]
      %v398 = vld [vmem:[%s381 + $0x60] sm:$0xf]
      %v399 = vld [vmem:[%s381 + $0x64] sm:$0xf]
      %v400 = vld [vmem:[%s381 + $0x6c] sm:$0xf]
      %v401 = vld [vmem:[%s381 + $0x70] sm:$0xf]
      %v402 = vld [vmem:[%s381 + $0x78] sm:$0xf]
      %v403 = vld [vmem:[%s381 + $0x7c] sm:$0xf]
      %v404 = vld [vmem:[%s381 + $0x84] sm:$0xf]
      %v405 = vld [vmem:[%s381 + $0x88] sm:$0xf]
      %v406 = vld [vmem:[%s381 + $0x90] sm:$0xf]
      %v407 = vld [vmem:[%s381 + $0x94] sm:$0xf]
      %v408 = vld [vmem:[%s381 + $0x9c] sm:$0xf]
      %v409 = vld [vmem:[%s381 + $0xa0] sm:$0xf]
      %v410 = vld [vmem:[%s381 + $0xa8] sm:$0xf]
      %v411 = vld [vmem:[%s381 + $0xac] sm:$0xf]
      %v412 = vld [vmem:[%s381 + $0xb4] sm:$0xf]
      %v413 = vld [vmem:[%s381 + $0xb8] sm:$0xf]
      %v414 = vld [vmem:[%s381 + $0x8] sm:$0x1]
      %v415 = vld [vmem:[%s381 + $0x14] sm:$0x1]
      %v416 = vld [vmem:[%s381 + $0x20] sm:$0x1]
      %v417 = vld [vmem:[%s381 + $0x2c] sm:$0x1]
      %v418 = vld [vmem:[%s381 + $0x38] sm:$0x1]
      %v419 = vld [vmem:[%s381 + $0x44] sm:$0x1]
      %v420 = vld [vmem:[%s381 + $0x50] sm:$0x1]
      %v421 = vld [vmem:[%s381 + $0x5c] sm:$0x1]
      %v422 = vld [vmem:[%s381 + $0x68] sm:$0x1]
      %v423 = vld [vmem:[%s381 + $0x74] sm:$0x1]
      %v424 = vld [vmem:[%s381 + $0x80] sm:$0x1]
      %v425 = vld [vmem:[%s381 + $0x8c] sm:$0x1]
      %v426 = vld [vmem:[%s381 + $0x98] sm:$0x1]
      %v427 = vld [vmem:[%s381 + $0xa4] sm:$0x1]
      %v428 = vld [vmem:[%s381 + $0xb0] sm:$0x1]
      %v429 = vld [vmem:[%s381 + $0xbc] sm:$0x1]
      %v430 = vld [vmem:[%s381] sm:$0xe]
      %v431 = vld [vmem:[%s381 + $0xc] sm:$0xe]
      %v432 = vld [vmem:[%s381 + $0x18] sm:$0xe]
      %v433 = vld [vmem:[%s381 + $0x24] sm:$0xe]
      %v434 = vld [vmem:[%s381 + $0x30] sm:$0xe]
      %v435 = vld [vmem:[%s381 + $0x3c] sm:$0xe]
      %v436 = vld [vmem:[%s381 + $0x48] sm:$0xe]
      %v437 = vld [vmem:[%s381 + $0x54] sm:$0xe]
      %v438 = vld [vmem:[%s381 + $0x60] sm:$0xe]
      %v439 = vld [vmem:[%s381 + $0x6c] sm:$0xe]
      %v440 = vld [vmem:[%s381 + $0x78] sm:$0xe]
      %v441 = vld [vmem:[%s381 + $0x84] sm:$0xe]
      %v442 = vld [vmem:[%s381 + $0x90] sm:$0xe]
      %v443 = vld [vmem:[%s381 + $0x9c] sm:$0xe]
      %v444 = vld [vmem:[%s381 + $0xa8] sm:$0xe]
      %v445 = vld [vmem:[%s381 + $0xb4] sm:$0xe]
      %v478 = vunpack.c.l.b16 %v246
      %v479 = vunpack.c.l.b16 %v247
      %v480 = vunpack.c.l.b16 %v248
      %v481 = vunpack.c.l.b16 %v249
      %v482 = vunpack.c.l.b16 %v250
      %v483 = vunpack.c.l.b16 %v251
      %v484 = vunpack.c.l.b16 %v252
      %v485 = vunpack.c.l.b16 %v253
      %v486 = vunpack.c.l.b16 %v254
      %v487 = vunpack.c.l.b16 %v255
      %v488 = vunpack.c.l.b16 %v256
      %v489 = vunpack.c.l.b16 %v257
      %v490 = vunpack.c.l.b16 %v258
      %v491 = vunpack.c.l.b16 %v259
      %v492 = vunpack.c.l.b16 %v260
      %v493 = vunpack.c.l.b16 %v261
      %v494 = vunpack.c.l.b16 %v262
      %v495 = vunpack.c.l.b16 %v263
      %v496 = vunpack.c.l.b16 %v264
      %v497 = vunpack.c.l.b16 %v265
      %v498 = vunpack.c.l.b16 %v266
      %v499 = vunpack.c.l.b16 %v267
      %v500 = vunpack.c.l.b16 %v268
      %v501 = vunpack.c.l.b16 %v269
      %v502 = vunpack.c.l.b16 %v270
      %v503 = vunpack.c.l.b16 %v271
      %v504 = vunpack.c.l.b16 %v272
      %v505 = vunpack.c.l.b16 %v273
      %v506 = vunpack.c.l.b16 %v274
      %v507 = vunpack.c.l.b16 %v275
      %v508 = vunpack.c.l.b16 %v276
      %v509 = vunpack.c.l.b16 %v277
      %v510 = vpack.c.b16 %v479, %v478
      %v511 = vpack.c.b16 %v481, %v480
      %v512 = vpack.c.b16 %v483, %v482
      %v513 = vpack.c.b16 %v485, %v484
      %v514 = vpack.c.b16 %v487, %v486
      %v515 = vpack.c.b16 %v489, %v488
      %v516 = vpack.c.b16 %v491, %v490
      %v517 = vpack.c.b16 %v493, %v492
      %v518 = vpack.c.b16 %v495, %v494
      %v519 = vpack.c.b16 %v497, %v496
      %v520 = vpack.c.b16 %v499, %v498
      %v521 = vpack.c.b16 %v501, %v500
      %v522 = vpack.c.b16 %v503, %v502
      %v523 = vpack.c.b16 %v505, %v504
      %v524 = vpack.c.b16 %v507, %v506
      %v525 = vpack.c.b16 %v509, %v508
      %v542 = vunpack.c.l.b16 %v278
      %v543 = vunpack.c.l.b16 %v279
      %v544 = vunpack.c.l.b16 %v280
      %v545 = vunpack.c.l.b16 %v281
      %v546 = vunpack.c.l.b16 %v282
      %v547 = vunpack.c.l.b16 %v283
      %v548 = vunpack.c.l.b16 %v284
      %v549 = vunpack.c.l.b16 %v285
      %v550 = vunpack.c.l.b16 %v286
      %v551 = vunpack.c.l.b16 %v287
      %v552 = vunpack.c.l.b16 %v288
      %v553 = vunpack.c.l.b16 %v289
      %v554 = vunpack.c.l.b16 %v290
      %v555 = vunpack.c.l.b16 %v291
      %v556 = vunpack.c.l.b16 %v292
      %v557 = vunpack.c.l.b16 %v293
      %v558 = vpack.c.b16 %v542, %v542
      %v559 = vpack.c.b16 %v543, %v543
      %v560 = vpack.c.b16 %v544, %v544
      %v561 = vpack.c.b16 %v545, %v545
      %v562 = vpack.c.b16 %v546, %v546
      %v563 = vpack.c.b16 %v547, %v547
      %v564 = vpack.c.b16 %v548, %v548
      %v565 = vpack.c.b16 %v549, %v549
      %v566 = vpack.c.b16 %v550, %v550
      %v567 = vpack.c.b16 %v551, %v551
      %v568 = vpack.c.b16 %v552, %v552
      %v569 = vpack.c.b16 %v553, %v553
      %v570 = vpack.c.b16 %v554, %v554
      %v571 = vpack.c.b16 %v555, %v555
      %v572 = vpack.c.b16 %v556, %v556
      %v573 = vpack.c.b16 %v557, %v557
      %vm574 = vsmask.f32 7424
      %v576 = vshrl.u32 %v510, 16
      %v578 = vshll.u32 %v510, 16
      %v580 = vrot.slane %v578, 1
      %v581 = vor.u32 %v576, %v580
      %v583 = vshll.u32 %v558, 16
      %v585 = vrot.slane %v583, 1
      %v586 = vsel %vm574, %v581, %v585
      %v588 = vshrl.u32 %v511, 16
      %v590 = vshll.u32 %v511, 16
      %v592 = vrot.slane %v590, 1
      %v593 = vor.u32 %v588, %v592
      %v595 = vshll.u32 %v559, 16
      %v597 = vrot.slane %v595, 1
      %v598 = vsel %vm574, %v593, %v597
      %v600 = vshrl.u32 %v512, 16
      %v602 = vshll.u32 %v512, 16
      %v604 = vrot.slane %v602, 1
      %v605 = vor.u32 %v600, %v604
      %v607 = vshll.u32 %v560, 16
      %v609 = vrot.slane %v607, 1
      %v610 = vsel %vm574, %v605, %v609
      %v612 = vshrl.u32 %v513, 16
      %v614 = vshll.u32 %v513, 16
      %v616 = vrot.slane %v614, 1
      %v617 = vor.u32 %v612, %v616
      %v619 = vshll.u32 %v561, 16
      %v621 = vrot.slane %v619, 1
      %v622 = vsel %vm574, %v617, %v621
      %v624 = vshrl.u32 %v514, 16
      %v626 = vshll.u32 %v514, 16
      %v628 = vrot.slane %v626, 1
      %v629 = vor.u32 %v624, %v628
      %v631 = vshll.u32 %v562, 16
      %v633 = vrot.slane %v631, 1
      %v634 = vsel %vm574, %v629, %v633
      %v636 = vshrl.u32 %v515, 16
      %v638 = vshll.u32 %v515, 16
      %v640 = vrot.slane %v638, 1
      %v641 = vor.u32 %v636, %v640
      %v643 = vshll.u32 %v563, 16
      %v645 = vrot.slane %v643, 1
      %v646 = vsel %vm574, %v641, %v645
      %v648 = vshrl.u32 %v516, 16
      %v650 = vshll.u32 %v516, 16
      %v652 = vrot.slane %v650, 1
      %v653 = vor.u32 %v648, %v652
      %v655 = vshll.u32 %v564, 16
      %v657 = vrot.slane %v655, 1
      %v658 = vsel %vm574, %v653, %v657
      %v660 = vshrl.u32 %v517, 16
      %v662 = vshll.u32 %v517, 16
      %v664 = vrot.slane %v662, 1
      %v665 = vor.u32 %v660, %v664
      %v667 = vshll.u32 %v565, 16
      %v669 = vrot.slane %v667, 1
      %v670 = vsel %vm574, %v665, %v669
      %v672 = vshrl.u32 %v518, 16
      %v674 = vshll.u32 %v518, 16
      %v676 = vrot.slane %v674, 1
      %v677 = vor.u32 %v672, %v676
      %v679 = vshll.u32 %v566, 16
      %v681 = vrot.slane %v679, 1
      %v682 = vsel %vm574, %v677, %v681
      %v684 = vshrl.u32 %v519, 16
      %v686 = vshll.u32 %v519, 16
      %v688 = vrot.slane %v686, 1
      %v689 = vor.u32 %v684, %v688
      %v691 = vshll.u32 %v567, 16
      %v693 = vrot.slane %v691, 1
      %v694 = vsel %vm574, %v689, %v693
      %v696 = vshrl.u32 %v520, 16
      %v698 = vshll.u32 %v520, 16
      %v700 = vrot.slane %v698, 1
      %v701 = vor.u32 %v696, %v700
      %v703 = vshll.u32 %v568, 16
      %v705 = vrot.slane %v703, 1
      %v706 = vsel %vm574, %v701, %v705
      %v708 = vshrl.u32 %v521, 16
      %v710 = vshll.u32 %v521, 16
      %v712 = vrot.slane %v710, 1
      %v713 = vor.u32 %v708, %v712
      %v715 = vshll.u32 %v569, 16
      %v717 = vrot.slane %v715, 1
      %v718 = vsel %vm574, %v713, %v717
      %v720 = vshrl.u32 %v522, 16
      %v722 = vshll.u32 %v522, 16
      %v724 = vrot.slane %v722, 1
      %v725 = vor.u32 %v720, %v724
      %v727 = vshll.u32 %v570, 16
      %v729 = vrot.slane %v727, 1
      %v730 = vsel %vm574, %v725, %v729
      %v732 = vshrl.u32 %v523, 16
      %v734 = vshll.u32 %v523, 16
      %v736 = vrot.slane %v734, 1
      %v737 = vor.u32 %v732, %v736
      %v739 = vshll.u32 %v571, 16
      %v741 = vrot.slane %v739, 1
      %v742 = vsel %vm574, %v737, %v741
      %v744 = vshrl.u32 %v524, 16
      %v746 = vshll.u32 %v524, 16
      %v748 = vrot.slane %v746, 1
      %v749 = vor.u32 %v744, %v748
      %v751 = vshll.u32 %v572, 16
      %v753 = vrot.slane %v751, 1
      %v754 = vsel %vm574, %v749, %v753
      %v756 = vshrl.u32 %v525, 16
      %v758 = vshll.u32 %v525, 16
      %v760 = vrot.slane %v758, 1
      %v761 = vor.u32 %v756, %v760
      %v763 = vshll.u32 %v573, 16
      %v765 = vrot.slane %v763, 1
      %v766 = vsel %vm574, %v761, %v765
      %767 = vrot.lane.b32.xlu0 %v586, 4
      %v768 = vpop.permute.xlu0 %767
      %769 = vrot.lane.b32.xlu0 %v598, 4
      %v770 = vpop.permute.xlu0 %769
      %771 = vrot.lane.b32.xlu0 %v610, 4
      %v772 = vpop.permute.xlu0 %771
      %773 = vrot.lane.b32.xlu0 %v622, 4
      %v774 = vpop.permute.xlu0 %773
      %775 = vrot.lane.b32.xlu0 %v634, 4
      %v776 = vpop.permute.xlu0 %775
      %777 = vrot.lane.b32.xlu0 %v646, 4
      %v778 = vpop.permute.xlu0 %777
      %779 = vrot.lane.b32.xlu0 %v658, 4
      %v780 = vpop.permute.xlu0 %779
      %781 = vrot.lane.b32.xlu0 %v670, 4
      %v782 = vpop.permute.xlu0 %781
      %783 = vrot.lane.b32.xlu0 %v682, 4
      %v784 = vpop.permute.xlu0 %783
      %785 = vrot.lane.b32.xlu0 %v694, 4
      %v786 = vpop.permute.xlu0 %785
      %787 = vrot.lane.b32.xlu0 %v706, 4
      %v788 = vpop.permute.xlu0 %787
      %789 = vrot.lane.b32.xlu0 %v718, 4
      %v790 = vpop.permute.xlu0 %789
      %791 = vrot.lane.b32.xlu0 %v730, 4
      %v792 = vpop.permute.xlu0 %791
      %793 = vrot.lane.b32.xlu0 %v742, 4
      %v794 = vpop.permute.xlu0 %793
      %795 = vrot.lane.b32.xlu0 %v754, 4
      %v796 = vpop.permute.xlu0 %795
      %797 = vrot.lane.b32.xlu0 %v766, 4
      %v798 = vpop.permute.xlu0 %797
      %v815 = vunpack.c.l.b16 %v294
      %v816 = vunpack.c.l.b16 %v295
      %v817 = vunpack.c.l.b16 %v296
      %v818 = vunpack.c.l.b16 %v297
      %v819 = vunpack.c.l.b16 %v298
      %v820 = vunpack.c.l.b16 %v299
      %v821 = vunpack.c.l.b16 %v300
      %v822 = vunpack.c.l.b16 %v301
      %v823 = vunpack.c.l.b16 %v302
      %v824 = vunpack.c.l.b16 %v303
      %v825 = vunpack.c.l.b16 %v304
      %v826 = vunpack.c.l.b16 %v305
      %v827 = vunpack.c.l.b16 %v306
      %v828 = vunpack.c.l.b16 %v307
      %v829 = vunpack.c.l.b16 %v308
      %v830 = vunpack.c.l.b16 %v309
      %v831 = vpack.c.b16 %v479, %v815
      %v832 = vpack.c.b16 %v481, %v816
      %v833 = vpack.c.b16 %v483, %v817
      %v834 = vpack.c.b16 %v485, %v818
      %v835 = vpack.c.b16 %v487, %v819
      %v836 = vpack.c.b16 %v489, %v820
      %v837 = vpack.c.b16 %v491, %v821
      %v838 = vpack.c.b16 %v493, %v822
      %v839 = vpack.c.b16 %v495, %v823
      %v840 = vpack.c.b16 %v497, %v824
      %v841 = vpack.c.b16 %v499, %v825
      %v842 = vpack.c.b16 %v501, %v826
      %v843 = vpack.c.b16 %v503, %v827
      %v844 = vpack.c.b16 %v505, %v828
      %v845 = vpack.c.b16 %v507, %v829
      %v846 = vpack.c.b16 %v509, %v830
      %vm847 = vcmask 1046528
      %v848 = vrot.slane %v831, 1
      %v849 = vrot.slane %v558, 1
      %v850 = vsel %vm847, %v848, %v849
      %v851 = vrot.slane %v832, 1
      %v852 = vrot.slane %v559, 1
      %v853 = vsel %vm847, %v851, %v852
      %v854 = vrot.slane %v833, 1
      %v855 = vrot.slane %v560, 1
      %v856 = vsel %vm847, %v854, %v855
      %v857 = vrot.slane %v834, 1
      %v858 = vrot.slane %v561, 1
      %v859 = vsel %vm847, %v857, %v858
      %v860 = vrot.slane %v835, 1
      %v861 = vrot.slane %v562, 1
      %v862 = vsel %vm847, %v860, %v861
      %v863 = vrot.slane %v836, 1
      %v864 = vrot.slane %v563, 1
      %v865 = vsel %vm847, %v863, %v864
      %v866 = vrot.slane %v837, 1
      %v867 = vrot.slane %v564, 1
      %v868 = vsel %vm847, %v866, %v867
      %v869 = vrot.slane %v838, 1
      %v870 = vrot.slane %v565, 1
      %v871 = vsel %vm847, %v869, %v870
      %v872 = vrot.slane %v839, 1
      %v873 = vrot.slane %v566, 1
      %v874 = vsel %vm847, %v872, %v873
      %v875 = vrot.slane %v840, 1
      %v876 = vrot.slane %v567, 1
      %v877 = vsel %vm847, %v875, %v876
      %v878 = vrot.slane %v841, 1
      %v879 = vrot.slane %v568, 1
      %v880 = vsel %vm847, %v878, %v879
      %v881 = vrot.slane %v842, 1
      %v882 = vrot.slane %v569, 1
      %v883 = vsel %vm847, %v881, %v882
      %v884 = vrot.slane %v843, 1
      %v885 = vrot.slane %v570, 1
      %v886 = vsel %vm847, %v884, %v885
      %v887 = vrot.slane %v844, 1
      %v888 = vrot.slane %v571, 1
      %v889 = vsel %vm847, %v887, %v888
      %v890 = vrot.slane %v845, 1
      %v891 = vrot.slane %v572, 1
      %v892 = vsel %vm847, %v890, %v891
      %v893 = vrot.slane %v846, 1
      %v894 = vrot.slane %v573, 1
      %v895 = vsel %vm847, %v893, %v894
      %896 = vrot.lane.b32.xlu0 %v850, 8
      %v897 = vpop.permute.xlu0 %896
      %898 = vrot.lane.b32.xlu0 %v853, 8
      %v899 = vpop.permute.xlu0 %898
      %900 = vrot.lane.b32.xlu0 %v856, 8
      %v901 = vpop.permute.xlu0 %900
      %902 = vrot.lane.b32.xlu0 %v859, 8
      %v903 = vpop.permute.xlu0 %902
      %904 = vrot.lane.b32.xlu0 %v862, 8
      %v905 = vpop.permute.xlu0 %904
      %906 = vrot.lane.b32.xlu0 %v865, 8
      %v907 = vpop.permute.xlu0 %906
      %908 = vrot.lane.b32.xlu0 %v868, 8
      %v909 = vpop.permute.xlu0 %908
      %910 = vrot.lane.b32.xlu0 %v871, 8
      %v911 = vpop.permute.xlu0 %910
      %912 = vrot.lane.b32.xlu0 %v874, 8
      %v913 = vpop.permute.xlu0 %912
      %914 = vrot.lane.b32.xlu0 %v877, 8
      %v915 = vpop.permute.xlu0 %914
      %916 = vrot.lane.b32.xlu0 %v880, 8
      %v917 = vpop.permute.xlu0 %916
      %918 = vrot.lane.b32.xlu0 %v883, 8
      %v919 = vpop.permute.xlu0 %918
      %920 = vrot.lane.b32.xlu0 %v886, 8
      %v921 = vpop.permute.xlu0 %920
      %922 = vrot.lane.b32.xlu0 %v889, 8
      %v923 = vpop.permute.xlu0 %922
      %924 = vrot.lane.b32.xlu0 %v892, 8
      %v925 = vpop.permute.xlu0 %924
      %926 = vrot.lane.b32.xlu0 %v895, 8
      %v927 = vpop.permute.xlu0 %926
      %v960 = vunpack.c.l.b16 %v314
      %v961 = vunpack.c.l.b16 %v315
      %v962 = vunpack.c.l.b16 %v316
      %v963 = vunpack.c.l.b16 %v317
      %v964 = vunpack.c.l.b16 %v318
      %v965 = vunpack.c.l.b16 %v319
      %v966 = vunpack.c.l.b16 %v320
      %v967 = vunpack.c.l.b16 %v321
      %v968 = vunpack.c.l.b16 %v322
      %v969 = vunpack.c.l.b16 %v323
      %v970 = vunpack.c.l.b16 %v324
      %v971 = vunpack.c.l.b16 %v325
      %v972 = vunpack.c.l.b16 %v326
      %v973 = vunpack.c.l.b16 %v327
      %v974 = vunpack.c.l.b16 %v328
      %v975 = vunpack.c.l.b16 %v329
      %v976 = vunpack.c.l.b16 %v330
      %v977 = vunpack.c.l.b16 %v331
      %v978 = vunpack.c.l.b16 %v332
      %v979 = vunpack.c.l.b16 %v333
      %v980 = vunpack.c.l.b16 %v334
      %v981 = vunpack.c.l.b16 %v335
      %v982 = vunpack.c.l.b16 %v336
      %v983 = vunpack.c.l.b16 %v337
      %v984 = vunpack.c.l.b16 %v338
      %v985 = vunpack.c.l.b16 %v339
      %v986 = vunpack.c.l.b16 %v340
      %v987 = vunpack.c.l.b16 %v341
      %v988 = vunpack.c.l.b16 %v342
      %v989 = vunpack.c.l.b16 %v343
      %v990 = vunpack.c.l.b16 %v344
      %v991 = vunpack.c.l.b16 %v345
      %v992 = vpack.c.b16 %v961, %v960
      %v993 = vpack.c.b16 %v963, %v962
      %v994 = vpack.c.b16 %v965, %v964
      %v995 = vpack.c.b16 %v967, %v966
      %v996 = vpack.c.b16 %v969, %v968
      %v997 = vpack.c.b16 %v971, %v970
      %v998 = vpack.c.b16 %v973, %v972
      %v999 = vpack.c.b16 %v975, %v974
      %v1000 = vpack.c.b16 %v977, %v976
      %v1001 = vpack.c.b16 %v979, %v978
      %v1002 = vpack.c.b16 %v981, %v980
      %v1003 = vpack.c.b16 %v983, %v982
      %v1004 = vpack.c.b16 %v985, %v984
      %v1005 = vpack.c.b16 %v987, %v986
      %v1006 = vpack.c.b16 %v989, %v988
      %v1007 = vpack.c.b16 %v991, %v990
      %1008 = vrot.lane.b32.xlu0 %v992, 12
      %v1009 = vpop.permute.xlu0 %1008
      %1010 = vrot.lane.b32.xlu0 %v993, 12
      %v1011 = vpop.permute.xlu0 %1010
      %1012 = vrot.lane.b32.xlu0 %v994, 12
      %v1013 = vpop.permute.xlu0 %1012
      %1014 = vrot.lane.b32.xlu0 %v995, 12
      %v1015 = vpop.permute.xlu0 %1014
      %1016 = vrot.lane.b32.xlu0 %v996, 12
      %v1017 = vpop.permute.xlu0 %1016
      %1018 = vrot.lane.b32.xlu0 %v997, 12
      %v1019 = vpop.permute.xlu0 %1018
      %1020 = vrot.lane.b32.xlu0 %v998, 12
      %v1021 = vpop.permute.xlu0 %1020
      %1022 = vrot.lane.b32.xlu0 %v999, 12
      %v1023 = vpop.permute.xlu0 %1022
      %1024 = vrot.lane.b32.xlu0 %v1000, 12
      %v1025 = vpop.permute.xlu0 %1024
      %1026 = vrot.lane.b32.xlu0 %v1001, 12
      %v1027 = vpop.permute.xlu0 %1026
      %1028 = vrot.lane.b32.xlu0 %v1002, 12
      %v1029 = vpop.permute.xlu0 %1028
      %1030 = vrot.lane.b32.xlu0 %v1003, 12
      %v1031 = vpop.permute.xlu0 %1030
      %1032 = vrot.lane.b32.xlu0 %v1004, 12
      %v1033 = vpop.permute.xlu0 %1032
      %1034 = vrot.lane.b32.xlu0 %v1005, 12
      %v1035 = vpop.permute.xlu0 %1034
      %1036 = vrot.lane.b32.xlu0 %v1006, 12
      %v1037 = vpop.permute.xlu0 %1036
      %1038 = vrot.lane.b32.xlu0 %v1007, 12
      %v1039 = vpop.permute.xlu0 %1038
      %v1056 = vunpack.c.l.b16 %v346
      %v1057 = vunpack.c.l.b16 %v347
      %v1058 = vunpack.c.l.b16 %v348
      %v1059 = vunpack.c.l.b16 %v349
      %v1060 = vunpack.c.l.b16 %v350
      %v1061 = vunpack.c.l.b16 %v351
      %v1062 = vunpack.c.l.b16 %v352
      %v1063 = vunpack.c.l.b16 %v353
      %v1064 = vunpack.c.l.b16 %v354
      %v1065 = vunpack.c.l.b16 %v355
      %v1066 = vunpack.c.l.b16 %v356
      %v1067 = vunpack.c.l.b16 %v357
      %v1068 = vunpack.c.l.b16 %v358
      %v1069 = vunpack.c.l.b16 %v359
      %v1070 = vunpack.c.l.b16 %v360
      %v1071 = vunpack.c.l.b16 %v361
      %v1072 = vpack.c.b16 %v1056, %v1056
      %v1073 = vpack.c.b16 %v1057, %v1057
      %v1074 = vpack.c.b16 %v1058, %v1058
      %v1075 = vpack.c.b16 %v1059, %v1059
      %v1076 = vpack.c.b16 %v1060, %v1060
      %v1077 = vpack.c.b16 %v1061, %v1061
      %v1078 = vpack.c.b16 %v1062, %v1062
      %v1079 = vpack.c.b16 %v1063, %v1063
      %v1080 = vpack.c.b16 %v1064, %v1064
      %v1081 = vpack.c.b16 %v1065, %v1065
      %v1082 = vpack.c.b16 %v1066, %v1066
      %v1083 = vpack.c.b16 %v1067, %v1067
      %v1084 = vpack.c.b16 %v1068, %v1068
      %v1085 = vpack.c.b16 %v1069, %v1069
      %v1086 = vpack.c.b16 %v1070, %v1070
      %v1087 = vpack.c.b16 %v1071, %v1071
      %v1089 = vshrl.u32 %v992, 16
      %v1091 = vshll.u32 %v992, 16
      %v1093 = vrot.slane %v1091, 1
      %v1094 = vor.u32 %v1089, %v1093
      %v1096 = vshll.u32 %v1072, 16
      %v1098 = vrot.slane %v1096, 1
      %v1099 = vsel %vm574, %v1094, %v1098
      %v1101 = vshrl.u32 %v993, 16
      %v1103 = vshll.u32 %v993, 16
      %v1105 = vrot.slane %v1103, 1
      %v1106 = vor.u32 %v1101, %v1105
      %v1108 = vshll.u32 %v1073, 16
      %v1110 = vrot.slane %v1108, 1
      %v1111 = vsel %vm574, %v1106, %v1110
      %v1113 = vshrl.u32 %v994, 16
      %v1115 = vshll.u32 %v994, 16
      %v1117 = vrot.slane %v1115, 1
      %v1118 = vor.u32 %v1113, %v1117
      %v1120 = vshll.u32 %v1074, 16
      %v1122 = vrot.slane %v1120, 1
      %v1123 = vsel %vm574, %v1118, %v1122
      %v1125 = vshrl.u32 %v995, 16
      %v1127 = vshll.u32 %v995, 16
      %v1129 = vrot.slane %v1127, 1
      %v1130 = vor.u32 %v1125, %v1129
      %v1132 = vshll.u32 %v1075, 16
      %v1134 = vrot.slane %v1132, 1
      %v1135 = vsel %vm574, %v1130, %v1134
      %v1137 = vshrl.u32 %v996, 16
      %v1139 = vshll.u32 %v996, 16
      %v1141 = vrot.slane %v1139, 1
      %v1142 = vor.u32 %v1137, %v1141
      %v1144 = vshll.u32 %v1076, 16
      %v1146 = vrot.slane %v1144, 1
      %v1147 = vsel %vm574, %v1142, %v1146
      %v1149 = vshrl.u32 %v997, 16
      %v1151 = vshll.u32 %v997, 16
      %v1153 = vrot.slane %v1151, 1
      %v1154 = vor.u32 %v1149, %v1153
      %v1156 = vshll.u32 %v1077, 16
      %v1158 = vrot.slane %v1156, 1
      %v1159 = vsel %vm574, %v1154, %v1158
      %v1161 = vshrl.u32 %v998, 16
      %v1163 = vshll.u32 %v998, 16
      %v1165 = vrot.slane %v1163, 1
      %v1166 = vor.u32 %v1161, %v1165
      %v1168 = vshll.u32 %v1078, 16
      %v1170 = vrot.slane %v1168, 1
      %v1171 = vsel %vm574, %v1166, %v1170
      %v1173 = vshrl.u32 %v999, 16
      %v1175 = vshll.u32 %v999, 16
      %v1177 = vrot.slane %v1175, 1
      %v1178 = vor.u32 %v1173, %v1177
      %v1180 = vshll.u32 %v1079, 16
      %v1182 = vrot.slane %v1180, 1
      %v1183 = vsel %vm574, %v1178, %v1182
      %v1185 = vshrl.u32 %v1000, 16
      %v1187 = vshll.u32 %v1000, 16
      %v1189 = vrot.slane %v1187, 1
      %v1190 = vor.u32 %v1185, %v1189
      %v1192 = vshll.u32 %v1080, 16
      %v1194 = vrot.slane %v1192, 1
      %v1195 = vsel %vm574, %v1190, %v1194
      %v1197 = vshrl.u32 %v1001, 16
      %v1199 = vshll.u32 %v1001, 16
      %v1201 = vrot.slane %v1199, 1
      %v1202 = vor.u32 %v1197, %v1201
      %v1204 = vshll.u32 %v1081, 16
      %v1206 = vrot.slane %v1204, 1
      %v1207 = vsel %vm574, %v1202, %v1206
      %v1209 = vshrl.u32 %v1002, 16
      %v1211 = vshll.u32 %v1002, 16
      %v1213 = vrot.slane %v1211, 1
      %v1214 = vor.u32 %v1209, %v1213
      %v1216 = vshll.u32 %v1082, 16
      %v1218 = vrot.slane %v1216, 1
      %v1219 = vsel %vm574, %v1214, %v1218
      %v1221 = vshrl.u32 %v1003, 16
      %v1223 = vshll.u32 %v1003, 16
      %v1225 = vrot.slane %v1223, 1
      %v1226 = vor.u32 %v1221, %v1225
      %v1228 = vshll.u32 %v1083, 16
      %v1230 = vrot.slane %v1228, 1
      %v1231 = vsel %vm574, %v1226, %v1230
      %v1233 = vshrl.u32 %v1004, 16
      %v1235 = vshll.u32 %v1004, 16
      %v1237 = vrot.slane %v1235, 1
      %v1238 = vor.u32 %v1233, %v1237
      %v1240 = vshll.u32 %v1084, 16
      %v1242 = vrot.slane %v1240, 1
      %v1243 = vsel %vm574, %v1238, %v1242
      %v1245 = vshrl.u32 %v1005, 16
      %v1247 = vshll.u32 %v1005, 16
      %v1249 = vrot.slane %v1247, 1
      %v1250 = vor.u32 %v1245, %v1249
      %v1252 = vshll.u32 %v1085, 16
      %v1254 = vrot.slane %v1252, 1
      %v1255 = vsel %vm574, %v1250, %v1254
      %v1257 = vshrl.u32 %v1006, 16
      %v1259 = vshll.u32 %v1006, 16
      %v1261 = vrot.slane %v1259, 1
      %v1262 = vor.u32 %v1257, %v1261
      %v1264 = vshll.u32 %v1086, 16
      %v1266 = vrot.slane %v1264, 1
      %v1267 = vsel %vm574, %v1262, %v1266
      %v1269 = vshrl.u32 %v1007, 16
      %v1271 = vshll.u32 %v1007, 16
      %v1273 = vrot.slane %v1271, 1
      %v1274 = vor.u32 %v1269, %v1273
      %v1276 = vshll.u32 %v1087, 16
      %v1278 = vrot.slane %v1276, 1
      %v1279 = vsel %vm574, %v1274, %v1278
      %1280 = vrot.lane.b32.xlu0 %v1099, 16
      %v1281 = vpop.permute.xlu0 %1280
      %1282 = vrot.lane.b32.xlu0 %v1111, 16
      %v1283 = vpop.permute.xlu0 %1282
      %1284 = vrot.lane.b32.xlu0 %v1123, 16
      %v1285 = vpop.permute.xlu0 %1284
      %1286 = vrot.lane.b32.xlu0 %v1135, 16
      %v1287 = vpop.permute.xlu0 %1286
      %1288 = vrot.lane.b32.xlu0 %v1147, 16
      %v1289 = vpop.permute.xlu0 %1288
      %1290 = vrot.lane.b32.xlu0 %v1159, 16
      %v1291 = vpop.permute.xlu0 %1290
      %1292 = vrot.lane.b32.xlu0 %v1171, 16
      %v1293 = vpop.permute.xlu0 %1292
      %1294 = vrot.lane.b32.xlu0 %v1183, 16
      %v1295 = vpop.permute.xlu0 %1294
      %1296 = vrot.lane.b32.xlu0 %v1195, 16
      %v1297 = vpop.permute.xlu0 %1296
      %1298 = vrot.lane.b32.xlu0 %v1207, 16
      %v1299 = vpop.permute.xlu0 %1298
      %1300 = vrot.lane.b32.xlu0 %v1219, 16
      %v1301 = vpop.permute.xlu0 %1300
      %1302 = vrot.lane.b32.xlu0 %v1231, 16
      %v1303 = vpop.permute.xlu0 %1302
      %1304 = vrot.lane.b32.xlu0 %v1243, 16
      %v1305 = vpop.permute.xlu0 %1304
      %1306 = vrot.lane.b32.xlu0 %v1255, 16
      %v1307 = vpop.permute.xlu0 %1306
      %1308 = vrot.lane.b32.xlu0 %v1267, 16
      %v1309 = vpop.permute.xlu0 %1308
      %1310 = vrot.lane.b32.xlu0 %v1279, 16
      %v1311 = vpop.permute.xlu0 %1310
      %v1328 = vunpack.c.l.b16 %v362
      %v1329 = vunpack.c.l.b16 %v363
      %v1330 = vunpack.c.l.b16 %v364
      %v1331 = vunpack.c.l.b16 %v365
      %v1332 = vunpack.c.l.b16 %v366
      %v1333 = vunpack.c.l.b16 %v367
      %v1334 = vunpack.c.l.b16 %v368
      %v1335 = vunpack.c.l.b16 %v369
      %v1336 = vunpack.c.l.b16 %v370
      %v1337 = vunpack.c.l.b16 %v371
      %v1338 = vunpack.c.l.b16 %v372
      %v1339 = vunpack.c.l.b16 %v373
      %v1340 = vunpack.c.l.b16 %v374
      %v1341 = vunpack.c.l.b16 %v375
      %v1342 = vunpack.c.l.b16 %v376
      %v1343 = vunpack.c.l.b16 %v377
      %v1344 = vpack.c.b16 %v961, %v1328
      %v1345 = vpack.c.b16 %v963, %v1329
      %v1346 = vpack.c.b16 %v965, %v1330
      %v1347 = vpack.c.b16 %v967, %v1331
      %v1348 = vpack.c.b16 %v969, %v1332
      %v1349 = vpack.c.b16 %v971, %v1333
      %v1350 = vpack.c.b16 %v973, %v1334
      %v1351 = vpack.c.b16 %v975, %v1335
      %v1352 = vpack.c.b16 %v977, %v1336
      %v1353 = vpack.c.b16 %v979, %v1337
      %v1354 = vpack.c.b16 %v981, %v1338
      %v1355 = vpack.c.b16 %v983, %v1339
      %v1356 = vpack.c.b16 %v985, %v1340
      %v1357 = vpack.c.b16 %v987, %v1341
      %v1358 = vpack.c.b16 %v989, %v1342
      %v1359 = vpack.c.b16 %v991, %v1343
      %v1360 = vrot.slane %v1344, 1
      %v1361 = vrot.slane %v1072, 1
      %v1362 = vsel %vm847, %v1360, %v1361
      %v1363 = vrot.slane %v1345, 1
      %v1364 = vrot.slane %v1073, 1
      %v1365 = vsel %vm847, %v1363, %v1364
      %v1366 = vrot.slane %v1346, 1
      %v1367 = vrot.slane %v1074, 1
      %v1368 = vsel %vm847, %v1366, %v1367
      %v1369 = vrot.slane %v1347, 1
      %v1370 = vrot.slane %v1075, 1
      %v1371 = vsel %vm847, %v1369, %v1370
      %v1372 = vrot.slane %v1348, 1
      %v1373 = vrot.slane %v1076, 1
      %v1374 = vsel %vm847, %v1372, %v1373
      %v1375 = vrot.slane %v1349, 1
      %v1376 = vrot.slane %v1077, 1
      %v1377 = vsel %vm847, %v1375, %v1376
      %v1378 = vrot.slane %v1350, 1
      %v1379 = vrot.slane %v1078, 1
      %v1380 = vsel %vm847, %v1378, %v1379
      %v1381 = vrot.slane %v1351, 1
      %v1382 = vrot.slane %v1079, 1
      %v1383 = vsel %vm847, %v1381, %v1382
      %v1384 = vrot.slane %v1352, 1
      %v1385 = vrot.slane %v1080, 1
      %v1386 = vsel %vm847, %v1384, %v1385
      %v1387 = vrot.slane %v1353, 1
      %v1388 = vrot.slane %v1081, 1
      %v1389 = vsel %vm847, %v1387, %v1388
      %v1390 = vrot.slane %v1354, 1
      %v1391 = vrot.slane %v1082, 1
      %v1392 = vsel %vm847, %v1390, %v1391
      %v1393 = vrot.slane %v1355, 1
      %v1394 = vrot.slane %v1083, 1
      %v1395 = vsel %vm847, %v1393, %v1394
      %v1396 = vrot.slane %v1356, 1
      %v1397 = vrot.slane %v1084, 1
      %v1398 = vsel %vm847, %v1396, %v1397
      %v1399 = vrot.slane %v1357, 1
      %v1400 = vrot.slane %v1085, 1
      %v1401 = vsel %vm847, %v1399, %v1400
      %v1402 = vrot.slane %v1358, 1
      %v1403 = vrot.slane %v1086, 1
      %v1404 = vsel %vm847, %v1402, %v1403
      %v1405 = vrot.slane %v1359, 1
      %v1406 = vrot.slane %v1087, 1
      %v1407 = vsel %vm847, %v1405, %v1406
      %1408 = vrot.lane.b32.xlu0 %v1362, 20
      %v1409 = vpop.permute.xlu0 %1408
      %1410 = vrot.lane.b32.xlu0 %v1365, 20
      %v1411 = vpop.permute.xlu0 %1410
      %1412 = vrot.lane.b32.xlu0 %v1368, 20
      %v1413 = vpop.permute.xlu0 %1412
      %1414 = vrot.lane.b32.xlu0 %v1371, 20
      %v1415 = vpop.permute.xlu0 %1414
      %1416 = vrot.lane.b32.xlu0 %v1374, 20
      %v1417 = vpop.permute.xlu0 %1416
      %1418 = vrot.lane.b32.xlu0 %v1377, 20
      %v1419 = vpop.permute.xlu0 %1418
      %1420 = vrot.lane.b32.xlu0 %v1380, 20
      %v1421 = vpop.permute.xlu0 %1420
      %1422 = vrot.lane.b32.xlu0 %v1383, 20
      %v1423 = vpop.permute.xlu0 %1422
      %1424 = vrot.lane.b32.xlu0 %v1386, 20
      %v1425 = vpop.permute.xlu0 %1424
      %1426 = vrot.lane.b32.xlu0 %v1389, 20
      %v1427 = vpop.permute.xlu0 %1426
      %1428 = vrot.lane.b32.xlu0 %v1392, 20
      %v1429 = vpop.permute.xlu0 %1428
      %1430 = vrot.lane.b32.xlu0 %v1395, 20
      %v1431 = vpop.permute.xlu0 %1430
      %1432 = vrot.lane.b32.xlu0 %v1398, 20
      %v1433 = vpop.permute.xlu0 %1432
      %1434 = vrot.lane.b32.xlu0 %v1401, 20
      %v1435 = vpop.permute.xlu0 %1434
      %1436 = vrot.lane.b32.xlu0 %v1404, 20
      %v1437 = vpop.permute.xlu0 %1436
      %1438 = vrot.lane.b32.xlu0 %v1407, 20
      %v1439 = vpop.permute.xlu0 %1438
      %v1472 = vunpack.c.l.b16 %v382
      %v1473 = vunpack.c.l.b16 %v383
      %v1474 = vunpack.c.l.b16 %v384
      %v1475 = vunpack.c.l.b16 %v385
      %v1476 = vunpack.c.l.b16 %v386
      %v1477 = vunpack.c.l.b16 %v387
      %v1478 = vunpack.c.l.b16 %v388
      %v1479 = vunpack.c.l.b16 %v389
      %v1480 = vunpack.c.l.b16 %v390
      %v1481 = vunpack.c.l.b16 %v391
      %v1482 = vunpack.c.l.b16 %v392
      %v1483 = vunpack.c.l.b16 %v393
      %v1484 = vunpack.c.l.b16 %v394
      %v1485 = vunpack.c.l.b16 %v395
      %v1486 = vunpack.c.l.b16 %v396
      %v1487 = vunpack.c.l.b16 %v397
      %v1488 = vunpack.c.l.b16 %v398
      %v1489 = vunpack.c.l.b16 %v399
      %v1490 = vunpack.c.l.b16 %v400
      %v1491 = vunpack.c.l.b16 %v401
      %v1492 = vunpack.c.l.b16 %v402
      %v1493 = vunpack.c.l.b16 %v403
      %v1494 = vunpack.c.l.b16 %v404
      %v1495 = vunpack.c.l.b16 %v405
      %v1496 = vunpack.c.l.b16 %v406
      %v1497 = vunpack.c.l.b16 %v407
      %v1498 = vunpack.c.l.b16 %v408
      %v1499 = vunpack.c.l.b16 %v409
      %v1500 = vunpack.c.l.b16 %v410
      %v1501 = vunpack.c.l.b16 %v411
      %v1502 = vunpack.c.l.b16 %v412
      %v1503 = vunpack.c.l.b16 %v413
      %v1504 = vpack.c.b16 %v1473, %v1472
      %v1505 = vpack.c.b16 %v1475, %v1474
      %v1506 = vpack.c.b16 %v1477, %v1476
      %v1507 = vpack.c.b16 %v1479, %v1478
      %v1508 = vpack.c.b16 %v1481, %v1480
      %v1509 = vpack.c.b16 %v1483, %v1482
      %v1510 = vpack.c.b16 %v1485, %v1484
      %v1511 = vpack.c.b16 %v1487, %v1486
      %v1512 = vpack.c.b16 %v1489, %v1488
      %v1513 = vpack.c.b16 %v1491, %v1490
      %v1514 = vpack.c.b16 %v1493, %v1492
      %v1515 = vpack.c.b16 %v1495, %v1494
      %v1516 = vpack.c.b16 %v1497, %v1496
      %v1517 = vpack.c.b16 %v1499, %v1498
      %v1518 = vpack.c.b16 %v1501, %v1500
      %v1519 = vpack.c.b16 %v1503, %v1502
      %1520 = vrot.lane.b32.xlu0 %v1504, 24
      %v1521 = vpop.permute.xlu0 %1520
      %1522 = vrot.lane.b32.xlu0 %v1505, 24
      %v1523 = vpop.permute.xlu0 %1522
      %1524 = vrot.lane.b32.xlu0 %v1506, 24
      %v1525 = vpop.permute.xlu0 %1524
      %1526 = vrot.lane.b32.xlu0 %v1507, 24
      %v1527 = vpop.permute.xlu0 %1526
      %1528 = vrot.lane.b32.xlu0 %v1508, 24
      %v1529 = vpop.permute.xlu0 %1528
      %1530 = vrot.lane.b32.xlu0 %v1509, 24
      %v1531 = vpop.permute.xlu0 %1530
      %1532 = vrot.lane.b32.xlu0 %v1510, 24
      %v1533 = vpop.permute.xlu0 %1532
      %1534 = vrot.lane.b32.xlu0 %v1511, 24
      %v1535 = vpop.permute.xlu0 %1534
      %1536 = vrot.lane.b32.xlu0 %v1512, 24
      %v1537 = vpop.permute.xlu0 %1536
      %1538 = vrot.lane.b32.xlu0 %v1513, 24
      %v1539 = vpop.permute.xlu0 %1538
      %1540 = vrot.lane.b32.xlu0 %v1514, 24
      %v1541 = vpop.permute.xlu0 %1540
      %1542 = vrot.lane.b32.xlu0 %v1515, 24
      %v1543 = vpop.permute.xlu0 %1542
      %1544 = vrot.lane.b32.xlu0 %v1516, 24
      %v1545 = vpop.permute.xlu0 %1544
      %1546 = vrot.lane.b32.xlu0 %v1517, 24
      %v1547 = vpop.permute.xlu0 %1546
      %1548 = vrot.lane.b32.xlu0 %v1518, 24
      %v1549 = vpop.permute.xlu0 %1548
      %1550 = vrot.lane.b32.xlu0 %v1519, 24
      %v1551 = vpop.permute.xlu0 %1550
      %v1568 = vunpack.c.l.b16 %v414
      %v1569 = vunpack.c.l.b16 %v415
      %v1570 = vunpack.c.l.b16 %v416
      %v1571 = vunpack.c.l.b16 %v417
      %v1572 = vunpack.c.l.b16 %v418
      %v1573 = vunpack.c.l.b16 %v419
      %v1574 = vunpack.c.l.b16 %v420
      %v1575 = vunpack.c.l.b16 %v421
      %v1576 = vunpack.c.l.b16 %v422
      %v1577 = vunpack.c.l.b16 %v423
      %v1578 = vunpack.c.l.b16 %v424
      %v1579 = vunpack.c.l.b16 %v425
      %v1580 = vunpack.c.l.b16 %v426
      %v1581 = vunpack.c.l.b16 %v427
      %v1582 = vunpack.c.l.b16 %v428
      %v1583 = vunpack.c.l.b16 %v429
      %v1584 = vpack.c.b16 %v1568, %v1568
      %v1585 = vpack.c.b16 %v1569, %v1569
      %v1586 = vpack.c.b16 %v1570, %v1570
      %v1587 = vpack.c.b16 %v1571, %v1571
      %v1588 = vpack.c.b16 %v1572, %v1572
      %v1589 = vpack.c.b16 %v1573, %v1573
      %v1590 = vpack.c.b16 %v1574, %v1574
      %v1591 = vpack.c.b16 %v1575, %v1575
      %v1592 = vpack.c.b16 %v1576, %v1576
      %v1593 = vpack.c.b16 %v1577, %v1577
      %v1594 = vpack.c.b16 %v1578, %v1578
      %v1595 = vpack.c.b16 %v1579, %v1579
      %v1596 = vpack.c.b16 %v1580, %v1580
      %v1597 = vpack.c.b16 %v1581, %v1581
      %v1598 = vpack.c.b16 %v1582, %v1582
      %v1599 = vpack.c.b16 %v1583, %v1583
      %v1601 = vshrl.u32 %v1504, 16
      %v1603 = vshll.u32 %v1504, 16
      %v1605 = vrot.slane %v1603, 1
      %v1606 = vor.u32 %v1601, %v1605
      %v1608 = vshll.u32 %v1584, 16
      %v1610 = vrot.slane %v1608, 1
      %v1611 = vsel %vm574, %v1606, %v1610
      %v1613 = vshrl.u32 %v1505, 16
      %v1615 = vshll.u32 %v1505, 16
      %v1617 = vrot.slane %v1615, 1
      %v1618 = vor.u32 %v1613, %v1617
      %v1620 = vshll.u32 %v1585, 16
      %v1622 = vrot.slane %v1620, 1
      %v1623 = vsel %vm574, %v1618, %v1622
      %v1625 = vshrl.u32 %v1506, 16
      %v1627 = vshll.u32 %v1506, 16
      %v1629 = vrot.slane %v1627, 1
      %v1630 = vor.u32 %v1625, %v1629
      %v1632 = vshll.u32 %v1586, 16
      %v1634 = vrot.slane %v1632, 1
      %v1635 = vsel %vm574, %v1630, %v1634
      %v1637 = vshrl.u32 %v1507, 16
      %v1639 = vshll.u32 %v1507, 16
      %v1641 = vrot.slane %v1639, 1
      %v1642 = vor.u32 %v1637, %v1641
      %v1644 = vshll.u32 %v1587, 16
      %v1646 = vrot.slane %v1644, 1
      %v1647 = vsel %vm574, %v1642, %v1646
      %v1649 = vshrl.u32 %v1508, 16
      %v1651 = vshll.u32 %v1508, 16
      %v1653 = vrot.slane %v1651, 1
      %v1654 = vor.u32 %v1649, %v1653
      %v1656 = vshll.u32 %v1588, 16
      %v1658 = vrot.slane %v1656, 1
      %v1659 = vsel %vm574, %v1654, %v1658
      %v1661 = vshrl.u32 %v1509, 16
      %v1663 = vshll.u32 %v1509, 16
      %v1665 = vrot.slane %v1663, 1
      %v1666 = vor.u32 %v1661, %v1665
      %v1668 = vshll.u32 %v1589, 16
      %v1670 = vrot.slane %v1668, 1
      %v1671 = vsel %vm574, %v1666, %v1670
      %v1673 = vshrl.u32 %v1510, 16
      %v1675 = vshll.u32 %v1510, 16
      %v1677 = vrot.slane %v1675, 1
      %v1678 = vor.u32 %v1673, %v1677
      %v1680 = vshll.u32 %v1590, 16
      %v1682 = vrot.slane %v1680, 1
      %v1683 = vsel %vm574, %v1678, %v1682
      %v1685 = vshrl.u32 %v1511, 16
      %v1687 = vshll.u32 %v1511, 16
      %v1689 = vrot.slane %v1687, 1
      %v1690 = vor.u32 %v1685, %v1689
      %v1692 = vshll.u32 %v1591, 16
      %v1694 = vrot.slane %v1692, 1
      %v1695 = vsel %vm574, %v1690, %v1694
      %v1697 = vshrl.u32 %v1512, 16
      %v1699 = vshll.u32 %v1512, 16
      %v1701 = vrot.slane %v1699, 1
      %v1702 = vor.u32 %v1697, %v1701
      %v1704 = vshll.u32 %v1592, 16
      %v1706 = vrot.slane %v1704, 1
      %v1707 = vsel %vm574, %v1702, %v1706
      %v1709 = vshrl.u32 %v1513, 16
      %v1711 = vshll.u32 %v1513, 16
      %v1713 = vrot.slane %v1711, 1
      %v1714 = vor.u32 %v1709, %v1713
      %v1716 = vshll.u32 %v1593, 16
      %v1718 = vrot.slane %v1716, 1
      %v1719 = vsel %vm574, %v1714, %v1718
      %v1721 = vshrl.u32 %v1514, 16
      %v1723 = vshll.u32 %v1514, 16
      %v1725 = vrot.slane %v1723, 1
      %v1726 = vor.u32 %v1721, %v1725
      %v1728 = vshll.u32 %v1594, 16
      %v1730 = vrot.slane %v1728, 1
      %v1731 = vsel %vm574, %v1726, %v1730
      %v1733 = vshrl.u32 %v1515, 16
      %v1735 = vshll.u32 %v1515, 16
      %v1737 = vrot.slane %v1735, 1
      %v1738 = vor.u32 %v1733, %v1737
      %v1740 = vshll.u32 %v1595, 16
      %v1742 = vrot.slane %v1740, 1
      %v1743 = vsel %vm574, %v1738, %v1742
      %v1745 = vshrl.u32 %v1516, 16
      %v1747 = vshll.u32 %v1516, 16
      %v1749 = vrot.slane %v1747, 1
      %v1750 = vor.u32 %v1745, %v1749
      %v1752 = vshll.u32 %v1596, 16
      %v1754 = vrot.slane %v1752, 1
      %v1755 = vsel %vm574, %v1750, %v1754
      %v1757 = vshrl.u32 %v1517, 16
      %v1759 = vshll.u32 %v1517, 16
      %v1761 = vrot.slane %v1759, 1
      %v1762 = vor.u32 %v1757, %v1761
      %v1764 = vshll.u32 %v1597, 16
      %v1766 = vrot.slane %v1764, 1
      %v1767 = vsel %vm574, %v1762, %v1766
      %v1769 = vshrl.u32 %v1518, 16
      %v1771 = vshll.u32 %v1518, 16
      %v1773 = vrot.slane %v1771, 1
      %v1774 = vor.u32 %v1769, %v1773
      %v1776 = vshll.u32 %v1598, 16
      %v1778 = vrot.slane %v1776, 1
      %v1779 = vsel %vm574, %v1774, %v1778
      %v1781 = vshrl.u32 %v1519, 16
      %v1783 = vshll.u32 %v1519, 16
      %v1785 = vrot.slane %v1783, 1
      %v1786 = vor.u32 %v1781, %v1785
      %v1788 = vshll.u32 %v1599, 16
      %v1790 = vrot.slane %v1788, 1
      %v1791 = vsel %vm574, %v1786, %v1790
      %1792 = vrot.lane.b32.xlu0 %v1611, 28
      %v1793 = vpop.permute.xlu0 %1792
      %1794 = vrot.lane.b32.xlu0 %v1623, 28
      %v1795 = vpop.permute.xlu0 %1794
      %1796 = vrot.lane.b32.xlu0 %v1635, 28
      %v1797 = vpop.permute.xlu0 %1796
      %1798 = vrot.lane.b32.xlu0 %v1647, 28
      %v1799 = vpop.permute.xlu0 %1798
      %1800 = vrot.lane.b32.xlu0 %v1659, 28
      %v1801 = vpop.permute.xlu0 %1800
      %1802 = vrot.lane.b32.xlu0 %v1671, 28
      %v1803 = vpop.permute.xlu0 %1802
      %1804 = vrot.lane.b32.xlu0 %v1683, 28
      %v1805 = vpop.permute.xlu0 %1804
      %1806 = vrot.lane.b32.xlu0 %v1695, 28
      %v1807 = vpop.permute.xlu0 %1806
      %1808 = vrot.lane.b32.xlu0 %v1707, 28
      %v1809 = vpop.permute.xlu0 %1808
      %1810 = vrot.lane.b32.xlu0 %v1719, 28
      %v1811 = vpop.permute.xlu0 %1810
      %1812 = vrot.lane.b32.xlu0 %v1731, 28
      %v1813 = vpop.permute.xlu0 %1812
      %1814 = vrot.lane.b32.xlu0 %v1743, 28
      %v1815 = vpop.permute.xlu0 %1814
      %1816 = vrot.lane.b32.xlu0 %v1755, 28
      %v1817 = vpop.permute.xlu0 %1816
      %1818 = vrot.lane.b32.xlu0 %v1767, 28
      %v1819 = vpop.permute.xlu0 %1818
      %1820 = vrot.lane.b32.xlu0 %v1779, 28
      %v1821 = vpop.permute.xlu0 %1820
      %1822 = vrot.lane.b32.xlu0 %v1791, 28
      %v1823 = vpop.permute.xlu0 %1822
      %v1840 = vunpack.c.l.b16 %v430
      %v1841 = vunpack.c.l.b16 %v431
      %v1842 = vunpack.c.l.b16 %v432
      %v1843 = vunpack.c.l.b16 %v433
      %v1844 = vunpack.c.l.b16 %v434
      %v1845 = vunpack.c.l.b16 %v435
      %v1846 = vunpack.c.l.b16 %v436
      %v1847 = vunpack.c.l.b16 %v437
      %v1848 = vunpack.c.l.b16 %v438
      %v1849 = vunpack.c.l.b16 %v439
      %v1850 = vunpack.c.l.b16 %v440
      %v1851 = vunpack.c.l.b16 %v441
      %v1852 = vunpack.c.l.b16 %v442
      %v1853 = vunpack.c.l.b16 %v443
      %v1854 = vunpack.c.l.b16 %v444
      %v1855 = vunpack.c.l.b16 %v445
      %v1856 = vpack.c.b16 %v1473, %v1840
      %v1857 = vpack.c.b16 %v1475, %v1841
      %v1858 = vpack.c.b16 %v1477, %v1842
      %v1859 = vpack.c.b16 %v1479, %v1843
      %v1860 = vpack.c.b16 %v1481, %v1844
      %v1861 = vpack.c.b16 %v1483, %v1845
      %v1862 = vpack.c.b16 %v1485, %v1846
      %v1863 = vpack.c.b16 %v1487, %v1847
      %v1864 = vpack.c.b16 %v1489, %v1848
      %v1865 = vpack.c.b16 %v1491, %v1849
      %v1866 = vpack.c.b16 %v1493, %v1850
      %v1867 = vpack.c.b16 %v1495, %v1851
      %v1868 = vpack.c.b16 %v1497, %v1852
      %v1869 = vpack.c.b16 %v1499, %v1853
      %v1870 = vpack.c.b16 %v1501, %v1854
      %v1871 = vpack.c.b16 %v1503, %v1855
      %v1872 = vrot.slane %v1856, 1
      %v1873 = vrot.slane %v1584, 1
      %v1874 = vsel %vm847, %v1872, %v1873
      %v1875 = vrot.slane %v1857, 1
      %v1876 = vrot.slane %v1585, 1
      %v1877 = vsel %vm847, %v1875, %v1876
      %v1878 = vrot.slane %v1858, 1
      %v1879 = vrot.slane %v1586, 1
      %v1880 = vsel %vm847, %v1878, %v1879
      %v1881 = vrot.slane %v1859, 1
      %v1882 = vrot.slane %v1587, 1
      %v1883 = vsel %vm847, %v1881, %v1882
      %v1884 = vrot.slane %v1860, 1
      %v1885 = vrot.slane %v1588, 1
      %v1886 = vsel %vm847, %v1884, %v1885
      %v1887 = vrot.slane %v1861, 1
      %v1888 = vrot.slane %v1589, 1
      %v1889 = vsel %vm847, %v1887, %v1888
      %v1890 = vrot.slane %v1862, 1
      %v1891 = vrot.slane %v1590, 1
      %v1892 = vsel %vm847, %v1890, %v1891
      %v1893 = vrot.slane %v1863, 1
      %v1894 = vrot.slane %v1591, 1
      %v1895 = vsel %vm847, %v1893, %v1894
      %v1896 = vrot.slane %v1864, 1
      %v1897 = vrot.slane %v1592, 1
      %v1898 = vsel %vm847, %v1896, %v1897
      %v1899 = vrot.slane %v1865, 1
      %v1900 = vrot.slane %v1593, 1
      %v1901 = vsel %vm847, %v1899, %v1900
      %v1902 = vrot.slane %v1866, 1
      %v1903 = vrot.slane %v1594, 1
      %v1904 = vsel %vm847, %v1902, %v1903
      %v1905 = vrot.slane %v1867, 1
      %v1906 = vrot.slane %v1595, 1
      %v1907 = vsel %vm847, %v1905, %v1906
      %v1908 = vrot.slane %v1868, 1
      %v1909 = vrot.slane %v1596, 1
      %v1910 = vsel %vm847, %v1908, %v1909
      %v1911 = vrot.slane %v1869, 1
      %v1912 = vrot.slane %v1597, 1
      %v1913 = vsel %vm847, %v1911, %v1912
      %v1914 = vrot.slane %v1870, 1
      %v1915 = vrot.slane %v1598, 1
      %v1916 = vsel %vm847, %v1914, %v1915
      %v1917 = vrot.slane %v1871, 1
      %v1918 = vrot.slane %v1599, 1
      %v1919 = vsel %vm847, %v1917, %v1918
      %1920 = vrot.lane.b32.xlu0 %v1874, 32
      %v1921 = vpop.permute.xlu0 %1920
      %1922 = vrot.lane.b32.xlu0 %v1877, 32
      %v1923 = vpop.permute.xlu0 %1922
      %1924 = vrot.lane.b32.xlu0 %v1880, 32
      %v1925 = vpop.permute.xlu0 %1924
      %1926 = vrot.lane.b32.xlu0 %v1883, 32
      %v1927 = vpop.permute.xlu0 %1926
      %1928 = vrot.lane.b32.xlu0 %v1886, 32
      %v1929 = vpop.permute.xlu0 %1928
      %1930 = vrot.lane.b32.xlu0 %v1889, 32
      %v1931 = vpop.permute.xlu0 %1930
      %1932 = vrot.lane.b32.xlu0 %v1892, 32
      %v1933 = vpop.permute.xlu0 %1932
      %1934 = vrot.lane.b32.xlu0 %v1895, 32
      %v1935 = vpop.permute.xlu0 %1934
      %1936 = vrot.lane.b32.xlu0 %v1898, 32
      %v1937 = vpop.permute.xlu0 %1936
      %1938 = vrot.lane.b32.xlu0 %v1901, 32
      %v1939 = vpop.permute.xlu0 %1938
      %1940 = vrot.lane.b32.xlu0 %v1904, 32
      %v1941 = vpop.permute.xlu0 %1940
      %1942 = vrot.lane.b32.xlu0 %v1907, 32
      %v1943 = vpop.permute.xlu0 %1942
      %1944 = vrot.lane.b32.xlu0 %v1910, 32
      %v1945 = vpop.permute.xlu0 %1944
      %1946 = vrot.lane.b32.xlu0 %v1913, 32
      %v1947 = vpop.permute.xlu0 %1946
      %1948 = vrot.lane.b32.xlu0 %v1916, 32
      %v1949 = vpop.permute.xlu0 %1948
      %1950 = vrot.lane.b32.xlu0 %v1919, 32
      %v1951 = vpop.permute.xlu0 %1950
      %vm1952 = vcmask 31744
      %v1954 = vsel %vm1952, %v510, %v768
      %v1956 = vsel %vm1952, %v511, %v770
      %v1958 = vsel %vm1952, %v512, %v772
      %v1960 = vsel %vm1952, %v513, %v774
      %v1962 = vsel %vm1952, %v514, %v776
      %v1964 = vsel %vm1952, %v515, %v778
      %v1966 = vsel %vm1952, %v516, %v780
      %v1968 = vsel %vm1952, %v517, %v782
      %v1970 = vsel %vm1952, %v518, %v784
      %v1972 = vsel %vm1952, %v519, %v786
      %v1974 = vsel %vm1952, %v520, %v788
      %v1976 = vsel %vm1952, %v521, %v790
      %v1978 = vsel %vm1952, %v522, %v792
      %v1980 = vsel %vm1952, %v523, %v794
      %v1982 = vsel %vm1952, %v524, %v796
      %v1984 = vsel %vm1952, %v525, %v798
      %vm1985 = vcmask 64512
      %v1987 = vsel %vm1985, %v1954, %v897
      %v1989 = vsel %vm1985, %v1956, %v899
      %v1991 = vsel %vm1985, %v1958, %v901
      %v1993 = vsel %vm1985, %v1960, %v903
      %v1995 = vsel %vm1985, %v1962, %v905
      %v1997 = vsel %vm1985, %v1964, %v907
      %v1999 = vsel %vm1985, %v1966, %v909
      %v2001 = vsel %vm1985, %v1968, %v911
      %v2003 = vsel %vm1985, %v1970, %v913
      %v2005 = vsel %vm1985, %v1972, %v915
      %v2007 = vsel %vm1985, %v1974, %v917
      %v2009 = vsel %vm1985, %v1976, %v919
      %v2011 = vsel %vm1985, %v1978, %v921
      %v2013 = vsel %vm1985, %v1980, %v923
      %v2015 = vsel %vm1985, %v1982, %v925
      %v2017 = vsel %vm1985, %v1984, %v927
      %vm2018 = vcmask 97280
      %v2020 = vsel %vm2018, %v1987, %v1009
      %v2022 = vsel %vm2018, %v1989, %v1011
      %v2024 = vsel %vm2018, %v1991, %v1013
      %v2026 = vsel %vm2018, %v1993, %v1015
      %v2028 = vsel %vm2018, %v1995, %v1017
      %v2030 = vsel %vm2018, %v1997, %v1019
      %v2032 = vsel %vm2018, %v1999, %v1021
      %v2034 = vsel %vm2018, %v2001, %v1023
      %v2036 = vsel %vm2018, %v2003, %v1025
      %v2038 = vsel %vm2018, %v2005, %v1027
      %v2040 = vsel %vm2018, %v2007, %v1029
      %v2042 = vsel %vm2018, %v2009, %v1031
      %v2044 = vsel %vm2018, %v2011, %v1033
      %v2046 = vsel %vm2018, %v2013, %v1035
      %v2048 = vsel %vm2018, %v2015, %v1037
      %v2050 = vsel %vm2018, %v2017, %v1039
      %vm2051 = vcmask 130048
      %v2053 = vsel %vm2051, %v2020, %v1281
      %v2055 = vsel %vm2051, %v2022, %v1283
      %v2057 = vsel %vm2051, %v2024, %v1285
      %v2059 = vsel %vm2051, %v2026, %v1287
      %v2061 = vsel %vm2051, %v2028, %v1289
      %v2063 = vsel %vm2051, %v2030, %v1291
      %v2065 = vsel %vm2051, %v2032, %v1293
      %v2067 = vsel %vm2051, %v2034, %v1295
      %v2069 = vsel %vm2051, %v2036, %v1297
      %v2071 = vsel %vm2051, %v2038, %v1299
      %v2073 = vsel %vm2051, %v2040, %v1301
      %v2075 = vsel %vm2051, %v2042, %v1303
      %v2077 = vsel %vm2051, %v2044, %v1305
      %v2079 = vsel %vm2051, %v2046, %v1307
      %v2081 = vsel %vm2051, %v2048, %v1309
      %v2083 = vsel %vm2051, %v2050, %v1311
      %vm2084 = vcmask 162816
      %v2086 = vsel %vm2084, %v2053, %v1409
      %v2088 = vsel %vm2084, %v2055, %v1411
      %v2090 = vsel %vm2084, %v2057, %v1413
      %v2092 = vsel %vm2084, %v2059, %v1415
      %v2094 = vsel %vm2084, %v2061, %v1417
      %v2096 = vsel %vm2084, %v2063, %v1419
      %v2098 = vsel %vm2084, %v2065, %v1421
      %v2100 = vsel %vm2084, %v2067, %v1423
      %v2102 = vsel %vm2084, %v2069, %v1425
      %v2104 = vsel %vm2084, %v2071, %v1427
      %v2106 = vsel %vm2084, %v2073, %v1429
      %v2108 = vsel %vm2084, %v2075, %v1431
      %v2110 = vsel %vm2084, %v2077, %v1433
      %v2112 = vsel %vm2084, %v2079, %v1435
      %v2114 = vsel %vm2084, %v2081, %v1437
      %v2116 = vsel %vm2084, %v2083, %v1439
      %vm2117 = vcmask 195584
      %v2119 = vsel %vm2117, %v2086, %v1521
      %v2121 = vsel %vm2117, %v2088, %v1523
      %v2123 = vsel %vm2117, %v2090, %v1525
      %v2125 = vsel %vm2117, %v2092, %v1527
      %v2127 = vsel %vm2117, %v2094, %v1529
      %v2129 = vsel %vm2117, %v2096, %v1531
      %v2131 = vsel %vm2117, %v2098, %v1533
      %v2133 = vsel %vm2117, %v2100, %v1535
      %v2135 = vsel %vm2117, %v2102, %v1537
      %v2137 = vsel %vm2117, %v2104, %v1539
      %v2139 = vsel %vm2117, %v2106, %v1541
      %v2141 = vsel %vm2117, %v2108, %v1543
      %v2143 = vsel %vm2117, %v2110, %v1545
      %v2145 = vsel %vm2117, %v2112, %v1547
      %v2147 = vsel %vm2117, %v2114, %v1549
      %v2149 = vsel %vm2117, %v2116, %v1551
      %vm2150 = vcmask 228352
      %v2152 = vsel %vm2150, %v2119, %v1793
      %v2154 = vsel %vm2150, %v2121, %v1795
      %v2156 = vsel %vm2150, %v2123, %v1797
      %v2158 = vsel %vm2150, %v2125, %v1799
      %v2160 = vsel %vm2150, %v2127, %v1801
      %v2162 = vsel %vm2150, %v2129, %v1803
      %v2164 = vsel %vm2150, %v2131, %v1805
      %v2166 = vsel %vm2150, %v2133, %v1807
      %v2168 = vsel %vm2150, %v2135, %v1809
      %v2170 = vsel %vm2150, %v2137, %v1811
      %v2172 = vsel %vm2150, %v2139, %v1813
      %v2174 = vsel %vm2150, %v2141, %v1815
      %v2176 = vsel %vm2150, %v2143, %v1817
      %v2178 = vsel %vm2150, %v2145, %v1819
      %v2180 = vsel %vm2150, %v2147, %v1821
      %v2182 = vsel %vm2150, %v2149, %v1823
      %vm2183 = vcmask 261120
      %v2185 = vsel %vm2183, %v2152, %v1921
      %v2187 = vsel %vm2183, %v2154, %v1923
      %v2189 = vsel %vm2183, %v2156, %v1925
      %v2191 = vsel %vm2183, %v2158, %v1927
      %v2193 = vsel %vm2183, %v2160, %v1929
      %v2195 = vsel %vm2183, %v2162, %v1931
      %v2197 = vsel %vm2183, %v2164, %v1933
      %v2199 = vsel %vm2183, %v2166, %v1935
      %v2201 = vsel %vm2183, %v2168, %v1937
      %v2203 = vsel %vm2183, %v2170, %v1939
      %v2205 = vsel %vm2183, %v2172, %v1941
      %v2207 = vsel %vm2183, %v2174, %v1943
      %v2209 = vsel %vm2183, %v2176, %v1945
      %v2211 = vsel %vm2183, %v2178, %v1947
      %v2213 = vsel %vm2183, %v2180, %v1949
      %v2215 = vsel %vm2183, %v2182, %v1951
      %v2216 = vld [vmem:[%s223] sm:$0xf]
      %v2217 = vld [vmem:[%s223 + $0x4] sm:$0xf]
      %v2218 = vld [vmem:[%s223 + $0x8] sm:$0xf]
      %v2219 = vld [vmem:[%s223 + $0xc] sm:$0xf]
      %v2220 = vld [vmem:[%s223 + $0x10] sm:$0x3]
      %v2222 = vlaneseq
      %v2223 = vshrl.u32 %v2222, 7
      %v2224 = vsub.s32 0, %v2223
      %v2225 = vrot.slane %v242, %v2224
      %v2232 = vunpack.c.l.b16 %v2216
      %v2233 = vunpack.c.l.b16 %v2217
      %v2234 = vunpack.c.l.b16 %v2218
      %v2235 = vunpack.c.l.b16 %v2219
      %v2236 = vunpack.c.l.b16 %v2220
      %v2237 = vpack.c.b16 %v2233, %v2232
      %v2238 = vpack.c.b16 %v2235, %v2234
      %v2239 = vpack.c.b16 %v2236, %v2236
      %vm2242 = vcmask 293888
      %v2243 = vsel %vm2242, %v2185, 0
      %v2245 = vsel %vm2242, %v2187, 0
      %v2247 = vsel %vm2242, %v2189, 0
      %v2249 = vsel %vm2242, %v2191, 0
      %v2251 = vsel %vm2242, %v2193, 0
      %v2253 = vsel %vm2242, %v2195, 0
      %v2255 = vsel %vm2242, %v2197, 0
      %v2257 = vsel %vm2242, %v2199, 0
      %v2259 = vsel %vm2242, %v2201, 0
      %v2261 = vsel %vm2242, %v2203, 0
      %v2263 = vsel %vm2242, %v2205, 0
      %v2265 = vsel %vm2242, %v2207, 0
      %v2267 = vsel %vm2242, %v2209, 0
      %v2269 = vsel %vm2242, %v2211, 0
      %v2271 = vsel %vm2242, %v2213, 0
      %v2273 = vsel %vm2242, %v2215, 0
      %vm2275 = vcmask 1041408
      %v2277 = vsel %vm2275, %v2239, 0
      %2279 = vmatprep.subr.bf16.mxu0 0
      %2280 = vmatpush1.bf16.msra.mxu0 0
      %2281 = vmatprep.subr.bf16.mxu0 0
      %2282 = vmatpush1.bf16.msra.mxu0 0
      %2283 = vmatprep.subr.bf16.mxu0 0
      %2284 = vmatpush1.bf16.msra.mxu0 0
      %2285 = vmatprep.subr.bf16.mxu0 0
      %2286 = vmatpush1.bf16.msra.mxu0 0
      %2287 = vmatprep.subr.bf16.mxu0 0
      %2288 = vmatpush1.bf16.msra.mxu0 0
      %2289 = vmatprep.subr.bf16.mxu0 0
      %2290 = vmatpush1.bf16.msra.mxu0 %v2277
      %2291 = vmatprep.subr.bf16.mxu0 0
      %2292 = vmatpush1.bf16.msra.mxu0 %v2238
      %2293 = vmatprep.subr.bf16.mxu0 0
      %2294 = vmatpush1.bf16.msra.mxu0 %v2237
      %2295 = vmatprep.subr.bf16.mxu0 0
      %2296 = vmatpush2.bf16.msra.mxu0 0
      %2297 = vmatprep.subr.bf16.mxu0 0
      %2298 = vmatpush2.bf16.msra.mxu0 0
      %2299 = vmatprep.subr.bf16.mxu0 0
      %2300 = vmatpush2.bf16.msra.mxu0 0
      %2301 = vmatprep.subr.bf16.mxu0 0
      %2302 = vmatpush2.bf16.msra.mxu0 0
      %2303 = vmatprep.subr.bf16.mxu0 0
      %2304 = vmatpush2.bf16.msra.mxu0 0
      %2305 = vmatprep.subr.bf16.mxu0 0
      %2306 = vmatpush2.bf16.msra.mxu0 0
      %2307 = vmatprep.subr.bf16.mxu0 0
      %2308 = vmatpush2.bf16.msra.mxu0 0
      %2309 = vmatprep.subr.bf16.mxu0 0
      %2310 = vmatpush2.bf16.msra.mxu0 0
      %2311 = vmatprep.mubr.bf16.mxu0 0
      %2312 = vmatmul.mubr.bf16.gmra.mxu0 %v2243
      %v2313 = vpop.f32.mrf.mxu0
      %v2314 = vadd.f32 %v2225, %v2313
      %v2315 = vpop.f32.mrf.mxu0
      %v2316 = vpop.f32.mrf.mxu0
      %v2317 = vadd.f32 %v2225, %v2316
      %v2318 = vpop.f32.mrf.mxu0
      %2319 = vmatprep.mubr.bf16.mxu0 0
      %2320 = vmatmul.mubr.bf16.gmra.mxu0 %v2245
      %v2321 = vpop.f32.mrf.mxu0
      %v2322 = vadd.f32 %v2225, %v2321
      %v2323 = vpop.f32.mrf.mxu0
      %v2324 = vpop.f32.mrf.mxu0
      %v2325 = vadd.f32 %v2225, %v2324
      %v2326 = vpop.f32.mrf.mxu0
      %2327 = vmatprep.mubr.bf16.mxu0 0
      %2328 = vmatmul.mubr.bf16.gmra.mxu0 %v2247
      %v2329 = vpop.f32.mrf.mxu0
      %v2330 = vadd.f32 %v2225, %v2329
      %v2331 = vpop.f32.mrf.mxu0
      %v2332 = vpop.f32.mrf.mxu0
      %v2333 = vadd.f32 %v2225, %v2332
      %v2334 = vpop.f32.mrf.mxu0
      %2335 = vmatprep.mubr.bf16.mxu0 0
      %2336 = vmatmul.mubr.bf16.gmra.mxu0 %v2249
      %v2337 = vpop.f32.mrf.mxu0
      %v2338 = vadd.f32 %v2225, %v2337
      %v2339 = vpop.f32.mrf.mxu0
      %v2340 = vpop.f32.mrf.mxu0
      %v2341 = vadd.f32 %v2225, %v2340
      %v2342 = vpop.f32.mrf.mxu0
      %2343 = vmatprep.mubr.bf16.mxu0 0
      %2344 = vmatmul.mubr.bf16.gmra.mxu0 %v2251
      %v2345 = vpop.f32.mrf.mxu0
      %v2346 = vadd.f32 %v2225, %v2345
      %v2347 = vpop.f32.mrf.mxu0
      %v2348 = vpop.f32.mrf.mxu0
      %v2349 = vadd.f32 %v2225, %v2348
      %v2350 = vpop.f32.mrf.mxu0
      %2351 = vmatprep.mubr.bf16.mxu0 0
      %2352 = vmatmul.mubr.bf16.gmra.mxu0 %v2253
      %v2353 = vpop.f32.mrf.mxu0
      %v2354 = vadd.f32 %v2225, %v2353
      %v2355 = vpop.f32.mrf.mxu0
      %v2356 = vpop.f32.mrf.mxu0
      %v2357 = vadd.f32 %v2225, %v2356
      %v2358 = vpop.f32.mrf.mxu0
      %2359 = vmatprep.mubr.bf16.mxu0 0
      %2360 = vmatmul.mubr.bf16.gmra.mxu0 %v2255
      %v2361 = vpop.f32.mrf.mxu0
      %v2362 = vadd.f32 %v2225, %v2361
      %v2363 = vpop.f32.mrf.mxu0
      %v2364 = vpop.f32.mrf.mxu0
      %v2365 = vadd.f32 %v2225, %v2364
      %v2366 = vpop.f32.mrf.mxu0
      %2367 = vmatprep.mubr.bf16.mxu0 0
      %2368 = vmatmul.mubr.bf16.gmra.mxu0 %v2257
      %v2369 = vpop.f32.mrf.mxu0
      %v2370 = vadd.f32 %v2225, %v2369
      %v2371 = vpop.f32.mrf.mxu0
      %v2372 = vpop.f32.mrf.mxu0
      %v2373 = vadd.f32 %v2225, %v2372
      %v2374 = vpop.f32.mrf.mxu0
      %2375 = vmatprep.mubr.bf16.mxu0 0
      %2376 = vmatmul.mubr.bf16.gmra.mxu0 %v2259
      %v2377 = vpop.f32.mrf.mxu0
      %v2378 = vadd.f32 %v2225, %v2377
      %v2379 = vpop.f32.mrf.mxu0
      %v2380 = vpop.f32.mrf.mxu0
      %v2381 = vadd.f32 %v2225, %v2380
      %v2382 = vpop.f32.mrf.mxu0
      %2383 = vmatprep.mubr.bf16.mxu0 0
      %2384 = vmatmul.mubr.bf16.gmra.mxu0 %v2261
      %v2385 = vpop.f32.mrf.mxu0
      %v2386 = vadd.f32 %v2225, %v2385
      %v2387 = vpop.f32.mrf.mxu0
      %v2388 = vpop.f32.mrf.mxu0
      %v2389 = vadd.f32 %v2225, %v2388
      %v2390 = vpop.f32.mrf.mxu0
      %2391 = vmatprep.mubr.bf16.mxu0 0
      %2392 = vmatmul.mubr.bf16.gmra.mxu0 %v2263
      %v2393 = vpop.f32.mrf.mxu0
      %v2394 = vadd.f32 %v2225, %v2393
      %v2395 = vpop.f32.mrf.mxu0
      %v2396 = vpop.f32.mrf.mxu0
      %v2397 = vadd.f32 %v2225, %v2396
      %v2398 = vpop.f32.mrf.mxu0
      %2399 = vmatprep.mubr.bf16.mxu0 0
      %2400 = vmatmul.mubr.bf16.gmra.mxu0 %v2265
      %v2401 = vpop.f32.mrf.mxu0
      %v2402 = vadd.f32 %v2225, %v2401
      %v2403 = vpop.f32.mrf.mxu0
      %v2404 = vpop.f32.mrf.mxu0
      %v2405 = vadd.f32 %v2225, %v2404
      %v2406 = vpop.f32.mrf.mxu0
      %2407 = vmatprep.mubr.bf16.mxu0 0
      %2408 = vmatmul.mubr.bf16.gmra.mxu0 %v2267
      %v2409 = vpop.f32.mrf.mxu0
      %v2410 = vadd.f32 %v2225, %v2409
      %v2411 = vpop.f32.mrf.mxu0
      %v2412 = vpop.f32.mrf.mxu0
      %v2413 = vadd.f32 %v2225, %v2412
      %v2414 = vpop.f32.mrf.mxu0
      %2415 = vmatprep.mubr.bf16.mxu0 0
      %2416 = vmatmul.mubr.bf16.gmra.mxu0 %v2269
      %v2417 = vpop.f32.mrf.mxu0
      %v2418 = vadd.f32 %v2225, %v2417
      %v2419 = vpop.f32.mrf.mxu0
      %v2420 = vpop.f32.mrf.mxu0
      %v2421 = vadd.f32 %v2225, %v2420
      %v2422 = vpop.f32.mrf.mxu0
      %2423 = vmatprep.mubr.bf16.mxu0 0
      %2424 = vmatmul.mubr.bf16.gmra.mxu0 %v2271
      %v2425 = vpop.f32.mrf.mxu0
      %v2426 = vadd.f32 %v2225, %v2425
      %v2427 = vpop.f32.mrf.mxu0
      %v2428 = vpop.f32.mrf.mxu0
      %v2429 = vadd.f32 %v2225, %v2428
      %v2430 = vpop.f32.mrf.mxu0
      %2431 = vmatprep.mubr.bf16.mxu0 0
      %2432 = vmatmul.mubr.bf16.gmra.mxu0 %v2273
      %v2433 = vpop.f32.mrf.mxu0
      %v2434 = vadd.f32 %v2225, %v2433
      %v2435 = vpop.f32.mrf.mxu0
      %v2436 = vpop.f32.mrf.mxu0
      %v2437 = vadd.f32 %v2225, %v2436
      %v2438 = vpop.f32.mrf.mxu0
      %2439 = vdwg.mxu0
      %v2440 = vmax.f32 %v2314, 0.0
      %v2441 = vmax.f32 %v2317, 0.0
      %v2442 = vmax.f32 %v2322, 0.0
      %v2443 = vmax.f32 %v2325, 0.0
      %v2444 = vmax.f32 %v2330, 0.0
      %v2445 = vmax.f32 %v2333, 0.0
      %v2446 = vmax.f32 %v2338, 0.0
      %v2447 = vmax.f32 %v2341, 0.0
      %v2448 = vmax.f32 %v2346, 0.0
      %v2449 = vmax.f32 %v2349, 0.0
      %v2450 = vmax.f32 %v2354, 0.0
      %v2451 = vmax.f32 %v2357, 0.0
      %v2452 = vmax.f32 %v2362, 0.0
      %v2453 = vmax.f32 %v2365, 0.0
      %v2454 = vmax.f32 %v2370, 0.0
      %v2455 = vmax.f32 %v2373, 0.0
      %v2456 = vmax.f32 %v2378, 0.0
      %v2457 = vmax.f32 %v2381, 0.0
      %v2458 = vmax.f32 %v2386, 0.0
      %v2459 = vmax.f32 %v2389, 0.0
      %v2460 = vmax.f32 %v2394, 0.0
      %v2461 = vmax.f32 %v2397, 0.0
      %v2462 = vmax.f32 %v2402, 0.0
      %v2463 = vmax.f32 %v2405, 0.0
      %v2464 = vmax.f32 %v2410, 0.0
      %v2465 = vmax.f32 %v2413, 0.0
      %v2466 = vmax.f32 %v2418, 0.0
      %v2467 = vmax.f32 %v2421, 0.0
      %v2468 = vmax.f32 %v2426, 0.0
      %v2469 = vmax.f32 %v2429, 0.0
      %v2470 = vmax.f32 %v2434, 0.0
      %v2471 = vmax.f32 %v2437, 0.0
      %2472 = vst [vmem:[%s238] sm:$0xff] %v2440
      %2473 = vst [vmem:[%s238 + $0x8] sm:$0xff] %v2441
      %2474 = vst [vmem:[%s238 + $0x10] sm:$0xff] %v2442
      %2475 = vst [vmem:[%s238 + $0x18] sm:$0xff] %v2443
      %2476 = vst [vmem:[%s238 + $0x20] sm:$0xff] %v2444
      %2477 = vst [vmem:[%s238 + $0x28] sm:$0xff] %v2445
      %2478 = vst [vmem:[%s238 + $0x30] sm:$0xff] %v2446
      %2479 = vst [vmem:[%s238 + $0x38] sm:$0xff] %v2447
      %2480 = vst [vmem:[%s238 + $0x40] sm:$0xff] %v2448
      %2481 = vst [vmem:[%s238 + $0x48] sm:$0xff] %v2449
      %2482 = vst [vmem:[%s238 + $0x50] sm:$0xff] %v2450
      %2483 = vst [vmem:[%s238 + $0x58] sm:$0xff] %v2451
      %2484 = vst [vmem:[%s238 + $0x60] sm:$0xff] %v2452
      %2485 = vst [vmem:[%s238 + $0x68] sm:$0xff] %v2453
      %2486 = vst [vmem:[%s238 + $0x70] sm:$0xff] %v2454
      %2487 = vst [vmem:[%s238 + $0x78] sm:$0xff] %v2455
      %2488 = vst [vmem:[%s238 + $0x80] sm:$0xff] %v2456
      %2489 = vst [vmem:[%s238 + $0x88] sm:$0xff] %v2457
      %2490 = vst [vmem:[%s238 + $0x90] sm:$0xff] %v2458
      %2491 = vst [vmem:[%s238 + $0x98] sm:$0xff] %v2459
      %2492 = vst [vmem:[%s238 + $0xa0] sm:$0xff] %v2460
      %2493 = vst [vmem:[%s238 + $0xa8] sm:$0xff] %v2461
      %2494 = vst [vmem:[%s238 + $0xb0] sm:$0xff] %v2462
      %2495 = vst [vmem:[%s238 + $0xb8] sm:$0xff] %v2463
      %2496 = vst [vmem:[%s238 + $0xc0] sm:$0xff] %v2464
      %2497 = vst [vmem:[%s238 + $0xc8] sm:$0xff] %v2465
      %2498 = vst [vmem:[%s238 + $0xd0] sm:$0xff] %v2466
      %2499 = vst [vmem:[%s238 + $0xd8] sm:$0xff] %v2467
      %2500 = vst [vmem:[%s238 + $0xe0] sm:$0xff] %v2468
      %2501 = vst [vmem:[%s238 + $0xe8] sm:$0xff] %v2469
      %2502 = vst [vmem:[%s238 + $0xf0] sm:$0xff] %v2470
      %2503 = vst [vmem:[%s238 + $0xf8] sm:$0xff] %v2471
      %s2504 = smul.u32 32, %s21
      %p2505 = scmp.lt.s32.totalorder %s19, 1
      %s2506 = scalar_select %p2505, %s19, 1
      %p2507 = scmp.lt.s32.totalorder %s2504, 31
      %s2508 = scalar_select %p2507, %s2504, 31
      %p2509 = scmp.lt.s32.totalorder %s20, 0
      %s2510 = scalar_select %p2509, %s20, 0
      %s2511 = sadd.s32 %s2510, %s2508
      %s2512 = smul.addr %s2506, 32
      %s2513 = sadd.s32 %s2511, %s2512
      %s2514 = smul.addr %s2513, 8
      %s2515 = scalar_lea.vmem %s3, %s2514
      // Predicated region
      $region33: #{convbn_forward.1} parent=31 // pred_check
        %p2516 = pneg %p133
      $region34: #{convbn_forward.1} parent=31 // pred_check_branch
        %2518 = sbr.rel (%p2516) target = $region36
      $region35: #{convbn_forward.1} parent=31 // pred_region
        %s2519 = smul.u32 32, %s21
      $region36: #{convbn_forward.1} parent=31 // pred_fallthru
        _
    $region32: #{convbn_forward.1} parent=5 // pred_fallthru
      _
    %p2520 = scmp.le.s32.totalorder 2, %s9
    // Predicated region
    $region37: #{convbn_forward.1} parent=5 // pred_check
      %p2521 = pneg %p2520
    $region38: #{convbn_forward.1} parent=5 // pred_check_branch
      %2523 = sbr.rel (%p2521) target = $region40
    $region39: #{convbn_forward.1} parent=5 // pred_region
      %s2524 = ssub.s32 %s9, 2
      // Predicated region
      $region41: #{convbn_forward.1} parent=39 // pred_check
        %p2525 = pneg %p139
      $region42: #{convbn_forward.1} parent=39 // pred_check_branch
        %2527 = sbr.rel (%p2525) target = $region44
      $region43: #{convbn_forward.1} parent=39 // pred_region
        %s2528 = smul.u32 32, %s24
        %p2529 = scmp.lt.s32.totalorder %s22, 1
        %s2530 = scalar_select %p2529, %s22, 1
        %p2531 = scmp.lt.s32.totalorder %s2528, 31
        %s2532 = scalar_select %p2531, %s2528, 31
        %p2533 = scmp.lt.s32.totalorder %s23, 0
        %s2534 = scalar_select %p2533, %s23, 0
        %s2535 = sadd.s32 %s2534, %s2532
        %s2536 = smul.addr %s2530, 32
        %s2537 = sadd.s32 %s2535, %s2536
        %s2538 = smul.addr %s2537, 8
        %s2539 = scalar_lea.vmem %s3, %s2538
      $region44: #{convbn_forward.1} parent=39 // pred_fallthru
        _
    $region40: #{convbn_forward.1} parent=5 // pred_fallthru
      _
  $region6: #{convbn_forward.1} parent=0 // loop_footer
    %s13 = sadd.s32 1, %s9
  $region7: #{convbn_forward.1} parent=0 // loop_footer_branch
    %8 = sbr.rel target = $region3
  $region8: #{convbn_forward.1} parent=0 // loop_exit
    _

</llo_original>
